<compile_context>
chip_gen: v6e
topology: v6e:2x2x1
jax: 0.10.0
libtpu: 0.0.40
codegen_flags: <defaults>
</compile_context>

<pallas_src>
import functools

import jax
import jax.numpy as jnp
from jax import lax
from jax.experimental import pallas as pl
from jax.experimental.pallas import tpu as pltpu

# Real (unpadded) feature sizes from the PyTorch module.
_H_IN = 100      # input Linear output width / LayerNorm width
_H_HID = 150     # hidden1 / hidden2 width
_H_H3 = 50       # hidden3 width

# Lane-padded sizes (multiples of 128).
_H_IN_P = 128
_H_HID_P = 256               # each fused branch padded to 256 (lane-aligned split)
_H_FUSED_P = 2 * _H_HID_P    # fused hidden1||hidden2 width = 512
_H_H3_P = 128
_OUT_P = 128                 # lane-dense output store; sliced in the wrapper


def _round_up(n, m):
    return ((n + m - 1) // m) * m


def _pad2d(a, rows, cols):
    r, c = a.shape
    return jnp.pad(a, ((0, rows - r), (0, cols - c)))


def _ffnn_kernel(x_ref,
                 w_in_ref, b_in_ref,
                 ln_g_ref, ln_b_ref,
                 w_h_ref, b_h_ref,
                 w_h3_ref, b_h3_ref,
                 w_out_ref, b_out_ref,
                 o_ref, *, ln_dim):
    x = x_ref[...]                                     # (TB, in_dim), compute dtype

    # ---- input Linear + ReLU (padded lanes 100:128 stay exactly zero) ----
    y = jnp.dot(x, w_in_ref[...], preferred_element_type=jnp.float32)
    y = jnp.maximum(y + b_in_ref[...], 0.0)            # (TB, 128) f32

    # ---- LayerNorm over the real 100 features (single reduction pass) ----
    inv_n = 1.0 / ln_dim
    s1 = jnp.sum(y, axis=-1, keepdims=True)
    s2 = jnp.sum(y * y, axis=-1, keepdims=True)
    mu = s1 * inv_n
    var = s2 * inv_n - mu * mu
    rstd = lax.rsqrt(var + 1e-5)                       # EUP, eps matches PyTorch default
    y = (y - mu) * rstd
    # padded gamma/beta are zero -> padded lanes remain exactly zero
    y = y * ln_g_ref[...] + ln_b_ref[...]
    y = y.astype(w_h_ref.dtype)

    # ---- fused hidden1 || hidden2 (one (128, 512) GEMM) + ReLU ----
    h = jnp.dot(y, w_h_ref[...], preferred_element_type=jnp.float32) + b_h_ref[...]
    h = jnp.maximum(h, 0.0)                            # (TB, 512) f32
    half = h.shape[-1] // 2                            # 256, lane-aligned split
    # TODO(synk): Dropout(0.2) is identity in eval mode; training-mode dropout
    # would need pltpu.prng_seed / pltpu.prng_random_bits here.
    h = (h[:, :half] + h[:, half:]).astype(w_h3_ref.dtype)   # (TB, 256)

    # ---- hidden3 + ReLU ----
    y3 = jnp.dot(h, w_h3_ref[...], preferred_element_type=jnp.float32) + b_h3_ref[...]
    y3 = jnp.maximum(y3, 0.0).astype(w_out_ref.dtype)  # (TB, 128)

    # ---- output Linear (lane-dense 128-wide store; wrapper slices) ----
    o_ref[...] = (jnp.dot(y3, w_out_ref[...], preferred_element_type=jnp.float32)
                  + b_out_ref[...]).astype(o_ref.dtype)


def _pack_params(p, compute_dtype):
    """Pad / fuse natural-layout params into the lane-aligned kernel layout.

    Weights go to compute_dtype (f32 or bf16); biases and LayerNorm params
    stay f32 (accumulation and normalization are always f32)."""
    f32 = jnp.float32
    packed = {}
    packed["w_in"] = _pad2d(p["w_in"], p["w_in"].shape[0], _H_IN_P).astype(compute_dtype)
    packed["b_in"] = _pad2d(p["b_in"], 1, _H_IN_P).astype(f32)
    packed["ln_g"] = _pad2d(p["ln_g"], 1, _H_IN_P).astype(f32)   # pads are zero
    packed["ln_b"] = _pad2d(p["ln_b"], 1, _H_IN_P).astype(f32)

    # Fuse hidden1 || hidden2; each branch occupies a lane-aligned 256 slot.
    w_h = jnp.zeros((_H_IN_P, _H_FUSED_P), f32)
    w_h = w_h.at[:_H_IN, :_H_HID].set(p["w_h1"])
    w_h = w_h.at[:_H_IN, _H_HID_P:_H_HID_P + _H_HID].set(p["w_h2"])
    packed["w_h"] = w_h.astype(compute_dtype)
    b_h = jnp.zeros((1, _H_FUSED_P), f32)
    b_h = b_h.at[:, :_H_HID].set(p["b_h1"])
    b_h = b_h.at[:, _H_HID_P:_H_HID_P + _H_HID].set(p["b_h2"])
    packed["b_h"] = b_h

    packed["w_h3"] = _pad2d(p["w_h3"], _H_HID_P, _H_H3_P).astype(compute_dtype)
    packed["b_h3"] = _pad2d(p["b_h3"], 1, _H_H3_P).astype(f32)
    packed["w_out"] = _pad2d(p["w_out"], _H_H3_P, _OUT_P).astype(compute_dtype)
    packed["b_out"] = _pad2d(p["b_out"], 1, _OUT_P).astype(f32)
    return packed


def ffnn_forward(x, params, *, batch_tile=1024, compute_dtype=jnp.float32):
    """x: (B, input_dim) f32.  params: natural-layout dict (W pre-transposed to
    (in_features, out_features)).  batch_tile: sweep 512-4096 for real batches
    (cap by per-chip scoped VMEM; ~8K max on v7x)."""
    B, in_dim = x.shape
    out_dim = params["w_out"].shape[1]

    packed = _pack_params(params, compute_dtype)

    # Batch tiling: round B up to a multiple of the tile; pad rows with zeros.
    tb = min(batch_tile, _round_up(B, 8))
    Bp = _round_up(B, tb)
    x_p = x.astype(compute_dtype)
    if Bp != B:
        x_p = jnp.pad(x_p, ((0, Bp - B), (0, 0)))

    param_order = ("w_in", "b_in", "ln_g", "ln_b",
                   "w_h", "b_h", "w_h3", "b_h3", "w_out", "b_out")
    param_arrays = [packed[k] for k in param_order]

    def full_spec(shape):
        # Full-array block with a constant index map -> DMA'd once, stays
        # VMEM-resident across the whole batch grid.
        return pl.BlockSpec(shape, lambda i: (0, 0))

    in_specs = [pl.BlockSpec((tb, in_dim), lambda i: (i, 0))]
    in_specs += [full_spec(a.shape) for a in param_arrays]
    out_spec = pl.BlockSpec((tb, _OUT_P), lambda i: (i, 0))

    out = pl.pallas_call(
        functools.partial(_ffnn_kernel, ln_dim=_H_IN),
        out_shape=jax.ShapeDtypeStruct((Bp, _OUT_P), jnp.float32),
        grid=(Bp // tb,),
        in_specs=in_specs,
        out_specs=out_spec,
        compiler_params=pltpu.CompilerParams(
            dimension_semantics=("parallel",)),
    )(x_p, *param_arrays)

    return out[:B, :out_dim]


def init_params(key, input_dim, output_dim=1):
    """Deterministic synthetic init (PyTorch-Linear-like uniform fan-in scaling).

    Weights are stored pre-transposed: (in_features, out_features)."""
    def linear(key, fan_in, fan_out):
        kw, kb = jax.random.split(key)
        bound = 1.0 / jnp.sqrt(fan_in)
        w = jax.random.uniform(kw, (fan_in, fan_out), jnp.float32, -bound, bound)
        b = jax.random.uniform(kb, (1, fan_out), jnp.float32, -bound, bound)
        return w, b

    k_in, k_h1, k_h2, k_h3, k_out = jax.random.split(key, 5)
    p = {}
    p["w_in"], p["b_in"] = linear(k_in, input_dim, _H_IN)
    p["ln_g"] = jnp.ones((1, _H_IN), jnp.float32)
    p["ln_b"] = jnp.zeros((1, _H_IN), jnp.float32)
    p["w_h1"], p["b_h1"] = linear(k_h1, _H_IN, _H_HID)
    p["w_h2"], p["b_h2"] = linear(k_h2, _H_IN, _H_HID)
    p["w_h3"], p["b_h3"] = linear(k_h3, _H_HID, _H_H3)
    p["w_out"], p["b_out"] = linear(k_out, _H_H3, output_dim)
    return p


def ffnn_reference(x, p):
    """Pure-JAX reference (natural layout, two-pass LayerNorm like PyTorch)."""
    y = jnp.maximum(x @ p["w_in"] + p["b_in"], 0.0)
    mu = jnp.mean(y, axis=-1, keepdims=True)
    var = jnp.mean(jnp.square(y - mu), axis=-1, keepdims=True)
    y = (y - mu) / jnp.sqrt(var + 1e-5) * p["ln_g"] + p["ln_b"]
    h1 = jnp.maximum(y @ p["w_h1"] + p["b_h1"], 0.0)
    h2 = jnp.maximum(y @ p["w_h2"] + p["b_h2"], 0.0)
    y = jnp.maximum((h1 + h2) @ p["w_h3"] + p["b_h3"], 0.0)
    return y @ p["w_out"] + p["b_out"]


if __name__ == "__main__":
    INPUT_DIM = 32
    OUTPUT_DIM = 1
    BATCH = 160   # matches the module's batch_size hyperparam; small demo shape

    key = jax.random.PRNGKey(0)
    k_x, k_p = jax.random.split(key)
    x = jax.random.normal(k_x, (BATCH, INPUT_DIM), jnp.float32)
    params = init_params(k_p, INPUT_DIM, OUTPUT_DIM)

    ref = ffnn_reference(x, params)

    # f32 path: batch_tile=64 -> 3 grid steps, exercises batch padding + grid.
    out = ffnn_forward(x, params, batch_tile=64, compute_dtype=jnp.float32)
    out = jax.block_until_ready(out)
    assert out.shape == (BATCH, OUTPUT_DIM)
    assert jnp.allclose(out, ref, atol=1e-4, rtol=1e-4), "f32 mismatch vs reference"

    # bf16-operand path (f32 accumulation / LayerNorm): looser tolerance.
    out_bf16 = ffnn_forward(x, params, batch_tile=64, compute_dtype=jnp.bfloat16)
    out_bf16 = jax.block_until_ready(out_bf16)
    assert out_bf16.shape == (BATCH, OUTPUT_DIM)
    assert jnp.allclose(out_bf16, ref, atol=1e-1, rtol=1e-1), "bf16 mismatch vs reference"

    print("KERNEL_OK")
</pallas_src>

<mosaic_0001>
module attributes {stable_mosaic.version = 11 : i64} {
  func.func @_ffnn_kernel(%arg0: i32, %arg1: memref<64x32xf32, #tpu.memory_space<vmem>>, %arg2: memref<32x128xf32, #tpu.memory_space<vmem>>, %arg3: memref<1x128xf32, #tpu.memory_space<vmem>>, %arg4: memref<1x128xf32, #tpu.memory_space<vmem>>, %arg5: memref<1x128xf32, #tpu.memory_space<vmem>>, %arg6: memref<128x512xf32, #tpu.memory_space<vmem>>, %arg7: memref<1x512xf32, #tpu.memory_space<vmem>>, %arg8: memref<256x128xf32, #tpu.memory_space<vmem>>, %arg9: memref<1x128xf32, #tpu.memory_space<vmem>>, %arg10: memref<128x128xf32, #tpu.memory_space<vmem>>, %arg11: memref<1x128xf32, #tpu.memory_space<vmem>>, %arg12: memref<64x128xf32, #tpu.memory_space<vmem>>) attributes {dimension_semantics = [#tpu.dimension_semantics<parallel>], iteration_bounds = array<i64: 3>, scalar_prefetch = 0 : i64, scratch_operands = 0 : i64, tpu.core_type = #tpu.core_type<tc>, window_params = [{transform_indices = @transform_0, window_bounds = array<i64: 64, 32>}, {pipeline_mode = #tpu.pipeline_mode<synchronous>, transform_indices = @transform_1, window_bounds = array<i64: 32, 128>}, {pipeline_mode = #tpu.pipeline_mode<synchronous>, transform_indices = @transform_2, window_bounds = array<i64: 1, 128>}, {pipeline_mode = #tpu.pipeline_mode<synchronous>, transform_indices = @transform_3, window_bounds = array<i64: 1, 128>}, {pipeline_mode = #tpu.pipeline_mode<synchronous>, transform_indices = @transform_4, window_bounds = array<i64: 1, 128>}, {pipeline_mode = #tpu.pipeline_mode<synchronous>, transform_indices = @transform_5, window_bounds = array<i64: 128, 512>}, {pipeline_mode = #tpu.pipeline_mode<synchronous>, transform_indices = @transform_6, window_bounds = array<i64: 1, 512>}, {pipeline_mode = #tpu.pipeline_mode<synchronous>, transform_indices = @transform_7, window_bounds = array<i64: 256, 128>}, {pipeline_mode = #tpu.pipeline_mode<synchronous>, transform_indices = @transform_8, window_bounds = array<i64: 1, 128>}, {pipeline_mode = #tpu.pipeline_mode<synchronous>, transform_indices = @transform_9, window_bounds = array<i64: 128, 128>}, {pipeline_mode = #tpu.pipeline_mode<synchronous>, transform_indices = @transform_10, window_bounds = array<i64: 1, 128>}, {transform_indices = @transform_11, window_bounds = array<i64: 64, 128>}]} {
    %c0 = arith.constant 0 : index
    %c0_0 = arith.constant 0 : index
    %0 = vector.load %arg1[%c0, %c0_0] : memref<64x32xf32, #tpu.memory_space<vmem>>, vector<64x32xf32>
    %c0_1 = arith.constant 0 : index
    %c0_2 = arith.constant 0 : index
    %1 = vector.load %arg2[%c0_1, %c0_2] : memref<32x128xf32, #tpu.memory_space<vmem>>, vector<32x128xf32>
    %cst = arith.constant dense<0.000000e+00> : vector<64x128xf32>
    %2 = tpu.matmul %0, %1, %cst {dimension_numbers = #tpu.dot_dimension_numbers<[1], [0], [0], [1], [0, 0, 1, 1], [], []>} : vector<64x32xf32>, vector<32x128xf32>, vector<64x128xf32> -> vector<64x128xf32>
    %c0_3 = arith.constant 0 : index
    %c0_4 = arith.constant 0 : index
    %3 = vector.load %arg3[%c0_3, %c0_4] : memref<1x128xf32, #tpu.memory_space<vmem>>, vector<1x128xf32>
    %4 = vector.broadcast %3 : vector<1x128xf32> to vector<64x128xf32>
    %5 = arith.addf %2, %4 : vector<64x128xf32>
    %cst_5 = arith.constant 0.000000e+00 : f32
    %6 = vector.broadcast %cst_5 : f32 to vector<64x128xf32>
    %7 = arith.maximumf %5, %6 : vector<64x128xf32>
    %cst_6 = arith.constant dense<0.000000e+00> : vector<64xf32>
    %8 = vector.multi_reduction <add>, %7, %cst_6 [1] : vector<64x128xf32> to vector<64xf32>
    %9 = vector.shape_cast %8 : vector<64xf32> to vector<64x1xf32>
    %10 = arith.mulf %7, %7 : vector<64x128xf32>
    %cst_7 = arith.constant dense<0.000000e+00> : vector<64xf32>
    %11 = vector.multi_reduction <add>, %10, %cst_7 [1] : vector<64x128xf32> to vector<64xf32>
    %12 = vector.shape_cast %11 : vector<64xf32> to vector<64x1xf32>
    %cst_8 = arith.constant 0.00999999977 : f32
    %13 = vector.broadcast %cst_8 : f32 to vector<64x1xf32>
    %14 = arith.mulf %9, %13 : vector<64x1xf32>
    %cst_9 = arith.constant 0.00999999977 : f32
    %15 = vector.broadcast %cst_9 : f32 to vector<64x1xf32>
    %16 = arith.mulf %12, %15 : vector<64x1xf32>
    %17 = arith.mulf %14, %14 : vector<64x1xf32>
    %18 = arith.subf %16, %17 : vector<64x1xf32>
    %cst_10 = arith.constant 9.99999974E-6 : f32
    %19 = vector.broadcast %cst_10 : f32 to vector<64x1xf32>
    %20 = arith.addf %18, %19 : vector<64x1xf32>
    %21 = math.rsqrt %20 : vector<64x1xf32>
    %22 = vector.broadcast %14 : vector<64x1xf32> to vector<64x128xf32>
    %23 = arith.subf %7, %22 : vector<64x128xf32>
    %24 = vector.broadcast %21 : vector<64x1xf32> to vector<64x128xf32>
    %25 = arith.mulf %23, %24 : vector<64x128xf32>
    %c0_11 = arith.constant 0 : index
    %c0_12 = arith.constant 0 : index
    %26 = vector.load %arg4[%c0_11, %c0_12] : memref<1x128xf32, #tpu.memory_space<vmem>>, vector<1x128xf32>
    %27 = vector.broadcast %26 : vector<1x128xf32> to vector<64x128xf32>
    %28 = arith.mulf %25, %27 : vector<64x128xf32>
    %c0_13 = arith.constant 0 : index
    %c0_14 = arith.constant 0 : index
    %29 = vector.load %arg5[%c0_13, %c0_14] : memref<1x128xf32, #tpu.memory_space<vmem>>, vector<1x128xf32>
    %30 = vector.broadcast %29 : vector<1x128xf32> to vector<64x128xf32>
    %31 = arith.addf %28, %30 : vector<64x128xf32>
    %c0_15 = arith.constant 0 : index
    %c0_16 = arith.constant 0 : index
    %32 = vector.load %arg6[%c0_15, %c0_16] : memref<128x512xf32, #tpu.memory_space<vmem>>, vector<128x512xf32>
    %cst_17 = arith.constant dense<0.000000e+00> : vector<64x512xf32>
    %33 = tpu.matmul %31, %32, %cst_17 {dimension_numbers = #tpu.dot_dimension_numbers<[1], [0], [0], [1], [0, 0, 1, 1], [], []>} : vector<64x128xf32>, vector<128x512xf32>, vector<64x512xf32> -> vector<64x512xf32>
    %c0_18 = arith.constant 0 : index
    %c0_19 = arith.constant 0 : index
    %34 = vector.load %arg7[%c0_18, %c0_19] : memref<1x512xf32, #tpu.memory_space<vmem>>, vector<1x512xf32>
    %35 = vector.broadcast %34 : vector<1x512xf32> to vector<64x512xf32>
    %36 = arith.addf %33, %35 : vector<64x512xf32>
    %cst_20 = arith.constant 0.000000e+00 : f32
    %37 = vector.broadcast %cst_20 : f32 to vector<64x512xf32>
    %38 = arith.maximumf %36, %37 : vector<64x512xf32>
    %39 = vector.extract_strided_slice %38 {offsets = [0, 0], sizes = [64, 256], strides = [1, 1]} : vector<64x512xf32> to vector<64x256xf32>
    %40 = vector.extract_strided_slice %38 {offsets = [0, 256], sizes = [64, 256], strides = [1, 1]} : vector<64x512xf32> to vector<64x256xf32>
    %41 = arith.addf %39, %40 : vector<64x256xf32>
    %c0_21 = arith.constant 0 : index
    %c0_22 = arith.constant 0 : index
    %42 = vector.load %arg8[%c0_21, %c0_22] : memref<256x128xf32, #tpu.memory_space<vmem>>, vector<256x128xf32>
    %cst_23 = arith.constant dense<0.000000e+00> : vector<64x128xf32>
    %43 = tpu.matmul %41, %42, %cst_23 {dimension_numbers = #tpu.dot_dimension_numbers<[1], [0], [0], [1], [0, 0, 1, 1], [], []>} : vector<64x256xf32>, vector<256x128xf32>, vector<64x128xf32> -> vector<64x128xf32>
    %c0_24 = arith.constant 0 : index
    %c0_25 = arith.constant 0 : index
    %44 = vector.load %arg9[%c0_24, %c0_25] : memref<1x128xf32, #tpu.memory_space<vmem>>, vector<1x128xf32>
    %45 = vector.broadcast %44 : vector<1x128xf32> to vector<64x128xf32>
    %46 = arith.addf %43, %45 : vector<64x128xf32>
    %cst_26 = arith.constant 0.000000e+00 : f32
    %47 = vector.broadcast %cst_26 : f32 to vector<64x128xf32>
    %48 = arith.maximumf %46, %47 : vector<64x128xf32>
    %c0_27 = arith.constant 0 : index
    %c0_28 = arith.constant 0 : index
    %49 = vector.load %arg10[%c0_27, %c0_28] : memref<128x128xf32, #tpu.memory_space<vmem>>, vector<128x128xf32>
    %cst_29 = arith.constant dense<0.000000e+00> : vector<64x128xf32>
    %50 = tpu.matmul %48, %49, %cst_29 {dimension_numbers = #tpu.dot_dimension_numbers<[1], [0], [0], [1], [0, 0, 1, 1], [], []>} : vector<64x128xf32>, vector<128x128xf32>, vector<64x128xf32> -> vector<64x128xf32>
    %c0_30 = arith.constant 0 : index
    %c0_31 = arith.constant 0 : index
    %51 = vector.load %arg11[%c0_30, %c0_31] : memref<1x128xf32, #tpu.memory_space<vmem>>, vector<1x128xf32>
    %52 = vector.broadcast %51 : vector<1x128xf32> to vector<64x128xf32>
    %53 = arith.addf %50, %52 : vector<64x128xf32>
    %c0_32 = arith.constant 0 : index
    %c0_33 = arith.constant 0 : index
    %54 = vector.load %arg12[%c0_32, %c0_33] : memref<64x128xf32, #tpu.memory_space<vmem>>, vector<64x128xf32>
    tpu.vector_store %arg12[%c0_32, %c0_33], %53 {strides = array<i32>} : memref<64x128xf32, #tpu.memory_space<vmem>>, vector<64x128xf32>,
    return
  }
  func.func @transform_0(%arg0: i32) -> (i32, i32) {
    %c0_i32 = arith.constant 0 : i32
    %c0_i32_0 = arith.constant 0 : i32
    return %arg0, %c0_i32 : i32, i32
  }
  func.func @transform_1(%arg0: i32) -> (i32, i32) {
    %c0_i32 = arith.constant 0 : i32
    %c0_i32_0 = arith.constant 0 : i32
    %c0_i32_1 = arith.constant 0 : i32
    return %c0_i32, %c0_i32_0 : i32, i32
  }
  func.func @transform_2(%arg0: i32) -> (i32, i32) {
    %c0_i32 = arith.constant 0 : i32
    %c0_i32_0 = arith.constant 0 : i32
    %c0_i32_1 = arith.constant 0 : i32
    return %c0_i32, %c0_i32_0 : i32, i32
  }
  func.func @transform_3(%arg0: i32) -> (i32, i32) {
    %c0_i32 = arith.constant 0 : i32
    %c0_i32_0 = arith.constant 0 : i32
    %c0_i32_1 = arith.constant 0 : i32
    return %c0_i32, %c0_i32_0 : i32, i32
  }
  func.func @transform_4(%arg0: i32) -> (i32, i32) {
    %c0_i32 = arith.constant 0 : i32
    %c0_i32_0 = arith.constant 0 : i32
    %c0_i32_1 = arith.constant 0 : i32
    return %c0_i32, %c0_i32_0 : i32, i32
  }
  func.func @transform_5(%arg0: i32) -> (i32, i32) {
    %c0_i32 = arith.constant 0 : i32
    %c0_i32_0 = arith.constant 0 : i32
    %c0_i32_1 = arith.constant 0 : i32
    return %c0_i32, %c0_i32_0 : i32, i32
  }
  func.func @transform_6(%arg0: i32) -> (i32, i32) {
    %c0_i32 = arith.constant 0 : i32
    %c0_i32_0 = arith.constant 0 : i32
    %c0_i32_1 = arith.constant 0 : i32
    return %c0_i32, %c0_i32_0 : i32, i32
  }
  func.func @transform_7(%arg0: i32) -> (i32, i32) {
    %c0_i32 = arith.constant 0 : i32
    %c0_i32_0 = arith.constant 0 : i32
    %c0_i32_1 = arith.constant 0 : i32
    return %c0_i32, %c0_i32_0 : i32, i32
  }
  func.func @transform_8(%arg0: i32) -> (i32, i32) {
    %c0_i32 = arith.constant 0 : i32
    %c0_i32_0 = arith.constant 0 : i32
    %c0_i32_1 = arith.constant 0 : i32
    return %c0_i32, %c0_i32_0 : i32, i32
  }
  func.func @transform_9(%arg0: i32) -> (i32, i32) {
    %c0_i32 = arith.constant 0 : i32
    %c0_i32_0 = arith.constant 0 : i32
    %c0_i32_1 = arith.constant 0 : i32
    return %c0_i32, %c0_i32_0 : i32, i32
  }
  func.func @transform_10(%arg0: i32) -> (i32, i32) {
    %c0_i32 = arith.constant 0 : i32
    %c0_i32_0 = arith.constant 0 : i32
    %c0_i32_1 = arith.constant 0 : i32
    return %c0_i32, %c0_i32_0 : i32, i32
  }
  func.func @transform_11(%arg0: i32) -> (i32, i32) {
    %c0_i32 = arith.constant 0 : i32
    %c0_i32_0 = arith.constant 0 : i32
    return %arg0, %c0_i32 : i32, i32
  }
}

</mosaic_0001>

<llo_original>
// kernel: tpu_custom_call.1
$region0: #{tpu_custom_call.1}
  #allocation0 [shape = 'u32[]', space=smem, size = 0x4, offset = 0x4, fixed_abs, tag = 'smem constant byte address 0x4 - core index']
  #allocation1 [shape = 'u32[144,128]{1,0:T(1,128)}', space=vmem, size = 0x12000, scoped, tag = 'internal scratch']
  %s0 = inlined_call_operand.vmem [shape: f32[192,32], index: 0, kind: input, shape index: {}]
  %s1 = inlined_call_operand.hbm [shape: f32[32,128], index: 1, kind: input, shape index: {}]
  %s2 = inlined_call_operand.vmem [shape: f32[1,128], index: 2, kind: input, shape index: {}]
  %s3 = inlined_call_operand.vmem [shape: f32[1,128], index: 3, kind: input, shape index: {}]
  %s4 = inlined_call_operand.vmem [shape: f32[1,128], index: 4, kind: input, shape index: {}]
  %s5 = inlined_call_operand.hbm [shape: f32[128,512], index: 5, kind: input, shape index: {}]
  %s6 = inlined_call_operand.vmem [shape: f32[1,512], index: 6, kind: input, shape index: {}]
  %s7 = inlined_call_operand.vmem [shape: f32[256,128], index: 7, kind: input, shape index: {}]
  %s8 = inlined_call_operand.vmem [shape: f32[1,128], index: 8, kind: input, shape index: {}]
  %s9 = inlined_call_operand.hbm [shape: f32[128,128], index: 9, kind: input, shape index: {}]
  %s10 = inlined_call_operand.vmem [shape: f32[1,128], index: 10, kind: input, shape index: {}]
  %s11 = inlined_call_operand.hbm [shape: f32[192,128], index: 11, kind: output, shape index: {}]
  %s12 = sld [smem:[#allocation0]]
  $region89: #{tpu_custom_call.1} parent=0
    _
  %s14 = ssub.s32 1, %s12
  %s15 = scalar_select 0, %s14, %s12
  $region1: #{tpu_custom_call.1} parent=0
    #allocation2 [shape = 'u8[16384]{0}', space=vmem, size = 0x4000, scoped, tag = 'input window, operand 1, single buffered']
    #allocation3 [shape = 's32[2]{0}', space=sflag, size = 0x8, scoped, tag = 'scoped memory for tpu_custom_call.1']
    #allocation4 [shape = 's32[2]{0}', space=sflag, size = 0x8, scoped, tag = 'scoped memory for tpu_custom_call.1']
    #allocation5 [shape = 'u8[262144]{0}', space=vmem, size = 0x40000, scoped, tag = 'input window, operand 5, single buffered']
    #allocation6 [shape = 's32[1]{0}', space=sflag, size = 0x4, scoped, tag = 'scoped memory for tpu_custom_call.1']
    #allocation7 [shape = 'u8[65536]{0}', space=vmem, size = 0x10000, scoped, tag = 'input window, operand 9, single buffered']
    #allocation8 [shape = 'u8[65536]{0}', space=vmem, size = 0x10000, scoped, tag = 'output window, operand 0']
    %16 = vsyncpa [#allocation3], 0
    %17 = vsyncpa [#allocation6], 0
    %18 = vsyncpa [#allocation4], 0
    %s19 = scalar_lea.sflag [#allocation4], 1
    %20 = vsyncpa %s19, 0
    loop: start=0, step=1, limit=5
    $region2: #{tpu_custom_call.1} parent=1 // loop_pre_header
      _
    $region3: #{tpu_custom_call.1} parent=1 // loop_header
      %s22 = sphi 0, %s26
      %p23 = scmp.ge.s32.totalorder %s22, 5
      %s32 = sphi 0, %s34
      %s35 = sphi 0, %s32
      %s36 = sphi 0, %s35
      %s52 = sphi 0, %s36
      %s56 = sphi 0, %s56
      %s58 = sphi 0, %s56
      %s59 = sphi 0, %s58
      %s73 = sphi 0, %s59
      %s77 = sphi 0, %s77
      %s79 = sphi 0, %s77
      %s80 = sphi 0, %s79
      %s94 = sphi 0, %s80
      %s98 = sphi 0, %s98
      %s100 = sphi 0, %s98
      %s101 = sphi 0, %s100
      %s115 = sphi 0, %s101
      %s119 = sphi 0, %s119
      %s121 = sphi 0, %s119
      %s122 = sphi 0, %s121
      %s136 = sphi 0, %s122
      %s140 = sphi 0, %s140
      %s142 = sphi 0, %s140
      %s143 = sphi 0, %s142
      %s157 = sphi 0, %s143
      %s161 = sphi 0, %s161
      %s163 = sphi 0, %s161
      %s164 = sphi 0, %s163
      %s178 = sphi 0, %s164
      %s182 = sphi 0, %s182
      %s184 = sphi 0, %s182
      %s185 = sphi 0, %s184
      %s199 = sphi 0, %s185
      %s203 = sphi 0, %s203
      %s205 = sphi 0, %s203
      %s206 = sphi 0, %s205
      %s220 = sphi 0, %s206
      %s224 = sphi 0, %s224
      %s226 = sphi 0, %s224
      %s227 = sphi 0, %s226
      %s241 = sphi 0, %s227
      %s245 = sphi 0, %s245
      %s247 = sphi 0, %s245
      %s248 = sphi 0, %s247
      %s262 = sphi 0, %s248
      %s268 = sphi 0, %s270
      %s271 = sphi 0, %s268
      %s272 = sphi 0, %s271
      %s288 = sphi 0, %s272
    $region4: #{tpu_custom_call.1} parent=1 // loop_header_branch
      %25 = sbr.rel (%p23) target = $region8
    $region5: #{tpu_custom_call.1} parent=1 // loop_body
      %s27 = ssub.s32 %s22, 1
      %s28 = ssub.s32 %s22, 2
      %s29 = sadd.s32 %s22, 1
      %s30 = ssub.s32 %s22, %s29
      %p31 = scmp.eq.s32.totalorder %s30, 0
      %s33 = sadd.s32 %s32, 1
      %s34 = scalar_select %p31, %s32, %s33
      %p37 = pneg %p31
      %p38 = scmp.eq.s32.totalorder %s22, 2
      %p39 = por %p37, %p38
      %p40 = scmp.ne.s32.totalorder %s32, %s35
      %p41 = scmp.eq.s32.totalorder %s22, 0
      %p42 = por %p40, %p41
      %p43 = scmp.ne.s32.totalorder %s32, %s35
      %p44 = scmp.eq.s32.totalorder %s27, 2
      %p45 = por %p43, %p44
      %p46 = scmp.ne.s32.totalorder %s35, %s36
      %p47 = scmp.eq.s32.totalorder %s27, 0
      %p48 = por %p46, %p47
      %p49 = scmp.ne.s32.totalorder %s35, %s36
      %p50 = scmp.eq.s32.totalorder %s28, 2
      %p51 = por %p49, %p50
      %p53 = scmp.ne.s32.totalorder %s36, %s52
      %p54 = scmp.eq.s32.totalorder %s28, 0
      %p55 = por %p53, %p54
      %s57 = sadd.s32 %s56, 1
      %p60 = scmp.eq.s32.totalorder %s22, 2
      %p61 = scmp.ne.s32.totalorder %s56, %s58
      %p62 = scmp.eq.s32.totalorder %s22, 0
      %p63 = por %p61, %p62
      %p64 = scmp.ne.s32.totalorder %s56, %s58
      %p65 = scmp.eq.s32.totalorder %s27, 2
      %p66 = por %p64, %p65
      %p67 = scmp.ne.s32.totalorder %s58, %s59
      %p68 = scmp.eq.s32.totalorder %s27, 0
      %p69 = por %p67, %p68
      %p70 = scmp.ne.s32.totalorder %s58, %s59
      %p71 = scmp.eq.s32.totalorder %s28, 2
      %p72 = por %p70, %p71
      %p74 = scmp.ne.s32.totalorder %s59, %s73
      %p75 = scmp.eq.s32.totalorder %s28, 0
      %p76 = por %p74, %p75
      %s78 = sadd.s32 %s77, 1
      %p81 = scmp.eq.s32.totalorder %s22, 2
      %p82 = scmp.ne.s32.totalorder %s77, %s79
      %p83 = scmp.eq.s32.totalorder %s22, 0
      %p84 = por %p82, %p83
      %p85 = scmp.ne.s32.totalorder %s77, %s79
      %p86 = scmp.eq.s32.totalorder %s27, 2
      %p87 = por %p85, %p86
      %p88 = scmp.ne.s32.totalorder %s79, %s80
      %p89 = scmp.eq.s32.totalorder %s27, 0
      %p90 = por %p88, %p89
      %p91 = scmp.ne.s32.totalorder %s79, %s80
      %p92 = scmp.eq.s32.totalorder %s28, 2
      %p93 = por %p91, %p92
      %p95 = scmp.ne.s32.totalorder %s80, %s94
      %p96 = scmp.eq.s32.totalorder %s28, 0
      %p97 = por %p95, %p96
      %s99 = sadd.s32 %s98, 1
      %p102 = scmp.eq.s32.totalorder %s22, 2
      %p103 = scmp.ne.s32.totalorder %s98, %s100
      %p104 = scmp.eq.s32.totalorder %s22, 0
      %p105 = por %p103, %p104
      %p106 = scmp.ne.s32.totalorder %s98, %s100
      %p107 = scmp.eq.s32.totalorder %s27, 2
      %p108 = por %p106, %p107
      %p109 = scmp.ne.s32.totalorder %s100, %s101
      %p110 = scmp.eq.s32.totalorder %s27, 0
      %p111 = por %p109, %p110
      %p112 = scmp.ne.s32.totalorder %s100, %s101
      %p113 = scmp.eq.s32.totalorder %s28, 2
      %p114 = por %p112, %p113
      %p116 = scmp.ne.s32.totalorder %s101, %s115
      %p117 = scmp.eq.s32.totalorder %s28, 0
      %p118 = por %p116, %p117
      %s120 = sadd.s32 %s119, 1
      %p123 = scmp.eq.s32.totalorder %s22, 2
      %p124 = scmp.ne.s32.totalorder %s119, %s121
      %p125 = scmp.eq.s32.totalorder %s22, 0
      %p126 = por %p124, %p125
      %p127 = scmp.ne.s32.totalorder %s119, %s121
      %p128 = scmp.eq.s32.totalorder %s27, 2
      %p129 = por %p127, %p128
      %p130 = scmp.ne.s32.totalorder %s121, %s122
      %p131 = scmp.eq.s32.totalorder %s27, 0
      %p132 = por %p130, %p131
      %p133 = scmp.ne.s32.totalorder %s121, %s122
      %p134 = scmp.eq.s32.totalorder %s28, 2
      %p135 = por %p133, %p134
      %p137 = scmp.ne.s32.totalorder %s122, %s136
      %p138 = scmp.eq.s32.totalorder %s28, 0
      %p139 = por %p137, %p138
      %s141 = sadd.s32 %s140, 1
      %p144 = scmp.eq.s32.totalorder %s22, 2
      %p145 = scmp.ne.s32.totalorder %s140, %s142
      %p146 = scmp.eq.s32.totalorder %s22, 0
      %p147 = por %p145, %p146
      %p148 = scmp.ne.s32.totalorder %s140, %s142
      %p149 = scmp.eq.s32.totalorder %s27, 2
      %p150 = por %p148, %p149
      %p151 = scmp.ne.s32.totalorder %s142, %s143
      %p152 = scmp.eq.s32.totalorder %s27, 0
      %p153 = por %p151, %p152
      %p154 = scmp.ne.s32.totalorder %s142, %s143
      %p155 = scmp.eq.s32.totalorder %s28, 2
      %p156 = por %p154, %p155
      %p158 = scmp.ne.s32.totalorder %s143, %s157
      %p159 = scmp.eq.s32.totalorder %s28, 0
      %p160 = por %p158, %p159
      %s162 = sadd.s32 %s161, 1
      %p165 = scmp.eq.s32.totalorder %s22, 2
      %p166 = scmp.ne.s32.totalorder %s161, %s163
      %p167 = scmp.eq.s32.totalorder %s22, 0
      %p168 = por %p166, %p167
      %p169 = scmp.ne.s32.totalorder %s161, %s163
      %p170 = scmp.eq.s32.totalorder %s27, 2
      %p171 = por %p169, %p170
      %p172 = scmp.ne.s32.totalorder %s163, %s164
      %p173 = scmp.eq.s32.totalorder %s27, 0
      %p174 = por %p172, %p173
      %p175 = scmp.ne.s32.totalorder %s163, %s164
      %p176 = scmp.eq.s32.totalorder %s28, 2
      %p177 = por %p175, %p176
      %p179 = scmp.ne.s32.totalorder %s164, %s178
      %p180 = scmp.eq.s32.totalorder %s28, 0
      %p181 = por %p179, %p180
      %s183 = sadd.s32 %s182, 1
      %p186 = scmp.eq.s32.totalorder %s22, 2
      %p187 = scmp.ne.s32.totalorder %s182, %s184
      %p188 = scmp.eq.s32.totalorder %s22, 0
      %p189 = por %p187, %p188
      %p190 = scmp.ne.s32.totalorder %s182, %s184
      %p191 = scmp.eq.s32.totalorder %s27, 2
      %p192 = por %p190, %p191
      %p193 = scmp.ne.s32.totalorder %s184, %s185
      %p194 = scmp.eq.s32.totalorder %s27, 0
      %p195 = por %p193, %p194
      %p196 = scmp.ne.s32.totalorder %s184, %s185
      %p197 = scmp.eq.s32.totalorder %s28, 2
      %p198 = por %p196, %p197
      %p200 = scmp.ne.s32.totalorder %s185, %s199
      %p201 = scmp.eq.s32.totalorder %s28, 0
      %p202 = por %p200, %p201
      %s204 = sadd.s32 %s203, 1
      %p207 = scmp.eq.s32.totalorder %s22, 2
      %p208 = scmp.ne.s32.totalorder %s203, %s205
      %p209 = scmp.eq.s32.totalorder %s22, 0
      %p210 = por %p208, %p209
      %p211 = scmp.ne.s32.totalorder %s203, %s205
      %p212 = scmp.eq.s32.totalorder %s27, 2
      %p213 = por %p211, %p212
      %p214 = scmp.ne.s32.totalorder %s205, %s206
      %p215 = scmp.eq.s32.totalorder %s27, 0
      %p216 = por %p214, %p215
      %p217 = scmp.ne.s32.totalorder %s205, %s206
      %p218 = scmp.eq.s32.totalorder %s28, 2
      %p219 = por %p217, %p218
      %p221 = scmp.ne.s32.totalorder %s206, %s220
      %p222 = scmp.eq.s32.totalorder %s28, 0
      %p223 = por %p221, %p222
      %s225 = sadd.s32 %s224, 1
      %p228 = scmp.eq.s32.totalorder %s22, 2
      %p229 = scmp.ne.s32.totalorder %s224, %s226
      %p230 = scmp.eq.s32.totalorder %s22, 0
      %p231 = por %p229, %p230
      %p232 = scmp.ne.s32.totalorder %s224, %s226
      %p233 = scmp.eq.s32.totalorder %s27, 2
      %p234 = por %p232, %p233
      %p235 = scmp.ne.s32.totalorder %s226, %s227
      %p236 = scmp.eq.s32.totalorder %s27, 0
      %p237 = por %p235, %p236
      %p238 = scmp.ne.s32.totalorder %s226, %s227
      %p239 = scmp.eq.s32.totalorder %s28, 2
      %p240 = por %p238, %p239
      %p242 = scmp.ne.s32.totalorder %s227, %s241
      %p243 = scmp.eq.s32.totalorder %s28, 0
      %p244 = por %p242, %p243
      %s246 = sadd.s32 %s245, 1
      %p249 = scmp.eq.s32.totalorder %s22, 2
      %p250 = scmp.ne.s32.totalorder %s245, %s247
      %p251 = scmp.eq.s32.totalorder %s22, 0
      %p252 = por %p250, %p251
      %p253 = scmp.ne.s32.totalorder %s245, %s247
      %p254 = scmp.eq.s32.totalorder %s27, 2
      %p255 = por %p253, %p254
      %p256 = scmp.ne.s32.totalorder %s247, %s248
      %p257 = scmp.eq.s32.totalorder %s27, 0
      %p258 = por %p256, %p257
      %p259 = scmp.ne.s32.totalorder %s247, %s248
      %p260 = scmp.eq.s32.totalorder %s28, 2
      %p261 = por %p259, %p260
      %p263 = scmp.ne.s32.totalorder %s248, %s262
      %p264 = scmp.eq.s32.totalorder %s28, 0
      %p265 = por %p263, %p264
      %s266 = ssub.s32 %s22, %s29
      %p267 = scmp.eq.s32.totalorder %s266, 0
      %s269 = sadd.s32 %s268, 1
      %s270 = scalar_select %p267, %s268, %s269
      %p273 = pneg %p267
      %p274 = scmp.eq.s32.totalorder %s22, 2
      %p275 = por %p273, %p274
      %p276 = scmp.ne.s32.totalorder %s268, %s271
      %p277 = scmp.eq.s32.totalorder %s22, 0
      %p278 = por %p276, %p277
      %p279 = scmp.ne.s32.totalorder %s268, %s271
      %p280 = scmp.eq.s32.totalorder %s27, 2
      %p281 = por %p279, %p280
      %p282 = scmp.ne.s32.totalorder %s271, %s272
      %p283 = scmp.eq.s32.totalorder %s27, 0
      %p284 = por %p282, %p283
      %p285 = scmp.ne.s32.totalorder %s271, %s272
      %p286 = scmp.eq.s32.totalorder %s28, 2
      %p287 = por %p285, %p286
      %p289 = scmp.ne.s32.totalorder %s272, %s288
      %p290 = scmp.eq.s32.totalorder %s28, 0
      %p291 = por %p289, %p290
      %p292 = scmp.le.s32.totalorder 1, %s22
      %p293 = scmp.lt.s32.totalorder %s22, 4
      %p294 = pnand %p292, %p293
      %p295 = pneg %p294
      // Predicated region
      $region9: #{tpu_custom_call.1} parent=5 // pred_check
        _
      $region10: #{tpu_custom_call.1} parent=5 // pred_check_branch
        %297 = sbr.rel (%p294) target = $region12
      $region11: #{tpu_custom_call.1} parent=5 // pred_region
        %s298 = ssub.s32 %s22, 1
        // Predicated region
        $region13: #{tpu_custom_call.1} parent=11 // pred_check
          %p299 = pneg %p69
        $region14: #{tpu_custom_call.1} parent=11 // pred_check_branch
          %301 = sbr.rel (%p299) target = $region16
        $region15: #{tpu_custom_call.1} parent=11 // pred_region
          %s303 = ssub.s32 512, 512
          %304 = vsyncadd [#allocation3], %s303
          %s305 = sshll.u32 [#allocation2], 4
          %s306 = int_to_ptr.vmem [resolvable:$true] %s305
          %311 = dma.hbm_to_vmem [thread:$0]  %s1, 512, %s306, [#allocation3], 128, 128, 8
        $region16: #{tpu_custom_call.1} parent=11 // pred_fallthru
          _
        // Predicated region
        $region17: #{tpu_custom_call.1} parent=11 // pred_check
          %p312 = pneg %p90
        $region18: #{tpu_custom_call.1} parent=11 // pred_check_branch
          %314 = sbr.rel (%p312) target = $region20
        $region19: #{tpu_custom_call.1} parent=11 // pred_region
          _
        $region20: #{tpu_custom_call.1} parent=11 // pred_fallthru
          _
        // Predicated region
        $region21: #{tpu_custom_call.1} parent=11 // pred_check
          %p315 = pneg %p111
        $region22: #{tpu_custom_call.1} parent=11 // pred_check_branch
          %317 = sbr.rel (%p315) target = $region24
        $region23: #{tpu_custom_call.1} parent=11 // pred_region
          _
        $region24: #{tpu_custom_call.1} parent=11 // pred_fallthru
          _
        // Predicated region
        $region25: #{tpu_custom_call.1} parent=11 // pred_check
          %p318 = pneg %p132
        $region26: #{tpu_custom_call.1} parent=11 // pred_check_branch
          %320 = sbr.rel (%p318) target = $region28
        $region27: #{tpu_custom_call.1} parent=11 // pred_region
          _
        $region28: #{tpu_custom_call.1} parent=11 // pred_fallthru
          _
        // Predicated region
        $region29: #{tpu_custom_call.1} parent=11 // pred_check
          %p321 = pneg %p153
        $region30: #{tpu_custom_call.1} parent=11 // pred_check_branch
          %323 = sbr.rel (%p321) target = $region32
        $region31: #{tpu_custom_call.1} parent=11 // pred_region
          %s325 = ssub.s32 8192, 8192
          %326 = vsyncadd [#allocation6], %s325
          %s327 = sshll.u32 [#allocation5], 4
          %s328 = int_to_ptr.vmem [resolvable:$true] %s327
          %333 = dma.hbm_to_vmem [thread:$0]  %s5, 8192, %s328, [#allocation6], 512, 512, 32
        $region32: #{tpu_custom_call.1} parent=11 // pred_fallthru
          _
        // Predicated region
        $region33: #{tpu_custom_call.1} parent=11 // pred_check
          %p334 = pneg %p174
        $region34: #{tpu_custom_call.1} parent=11 // pred_check_branch
          %336 = sbr.rel (%p334) target = $region36
        $region35: #{tpu_custom_call.1} parent=11 // pred_region
          _
        $region36: #{tpu_custom_call.1} parent=11 // pred_fallthru
          _
        // Predicated region
        $region37: #{tpu_custom_call.1} parent=11 // pred_check
          %p337 = pneg %p195
        $region38: #{tpu_custom_call.1} parent=11 // pred_check_branch
          %339 = sbr.rel (%p337) target = $region40
        $region39: #{tpu_custom_call.1} parent=11 // pred_region
          _
        $region40: #{tpu_custom_call.1} parent=11 // pred_fallthru
          _
        // Predicated region
        $region41: #{tpu_custom_call.1} parent=11 // pred_check
          %p340 = pneg %p216
        $region42: #{tpu_custom_call.1} parent=11 // pred_check_branch
          %342 = sbr.rel (%p340) target = $region44
        $region43: #{tpu_custom_call.1} parent=11 // pred_region
          _
        $region44: #{tpu_custom_call.1} parent=11 // pred_fallthru
          _
        // Predicated region
        $region45: #{tpu_custom_call.1} parent=11 // pred_check
          %p343 = pneg %p237
        $region46: #{tpu_custom_call.1} parent=11 // pred_check_branch
          %345 = sbr.rel (%p343) target = $region48
        $region47: #{tpu_custom_call.1} parent=11 // pred_region
          %s347 = ssub.s32 2048, 2048
          %348 = vsyncadd [#allocation6], %s347
          %s349 = sshll.u32 [#allocation7], 4
          %s350 = int_to_ptr.vmem [resolvable:$true] %s349
          %355 = dma.hbm_to_vmem [thread:$0]  %s9, 2048, %s350, [#allocation6], 128, 128, 8
        $region48: #{tpu_custom_call.1} parent=11 // pred_fallthru
          _
        // Predicated region
        $region49: #{tpu_custom_call.1} parent=11 // pred_check
          %p356 = pneg %p258
        $region50: #{tpu_custom_call.1} parent=11 // pred_check_branch
          %358 = sbr.rel (%p356) target = $region52
        $region51: #{tpu_custom_call.1} parent=11 // pred_region
          _
        $region52: #{tpu_custom_call.1} parent=11 // pred_fallthru
          _
      $region12: #{tpu_custom_call.1} parent=5 // pred_fallthru
        _
      %p359 = scmp.lt.s32.totalorder %s22, 3
      // Predicated region
      $region53: #{tpu_custom_call.1} parent=5 // pred_check
        %p360 = pneg %p359
      $region54: #{tpu_custom_call.1} parent=5 // pred_check_branch
        %362 = sbr.rel (%p360) target = $region56
      $region55: #{tpu_custom_call.1} parent=5 // pred_region
        // Predicated region
        $region57: #{tpu_custom_call.1} parent=55 // pred_check
          %p363 = pneg %p42
        $region58: #{tpu_custom_call.1} parent=55 // pred_check_branch
          %365 = sbr.rel (%p363) target = $region60
        $region59: #{tpu_custom_call.1} parent=55 // pred_region
          %s366 = smul.u32 8, %s22
          %p367 = scmp.lt.s32.totalorder %s366, 23
          %s368 = scalar_select %p367, %s366, 23
          %s369 = smul.addr %s368, 8
          %s370 = scalar_lea.vmem %s0, %s369
          %s371 = smul.u32 8, %s22
        $region60: #{tpu_custom_call.1} parent=55 // pred_fallthru
          _
      $region56: #{tpu_custom_call.1} parent=5 // pred_fallthru
        _
      %p372 = scmp.le.s32.totalorder 1, %s22
      %p373 = scmp.lt.s32.totalorder %s22, 4
      %p374 = pnand %p372, %p373
      %p375 = pneg %p374
      // Predicated region
      $region61: #{tpu_custom_call.1} parent=5 // pred_check
        _
      $region62: #{tpu_custom_call.1} parent=5 // pred_check_branch
        %377 = sbr.rel (%p374) target = $region64
      $region63: #{tpu_custom_call.1} parent=5 // pred_region
        %s378 = ssub.s32 %s22, 1
        // Predicated region
        $region65: #{tpu_custom_call.1} parent=63 // pred_check
          %p379 = pneg %p69
        $region66: #{tpu_custom_call.1} parent=63 // pred_check_branch
          %381 = sbr.rel (%p379) target = $region68
        $region67: #{tpu_custom_call.1} parent=63 // pred_region
          %382 = dma.done [#allocation3], 512
        $region68: #{tpu_custom_call.1} parent=63 // pred_fallthru
          _
        // Predicated region
        $region69: #{tpu_custom_call.1} parent=63 // pred_check
          %p383 = pneg %p153
        $region70: #{tpu_custom_call.1} parent=63 // pred_check_branch
          %385 = sbr.rel (%p383) target = $region72
        $region71: #{tpu_custom_call.1} parent=63 // pred_region
          %386 = dma.done [#allocation6], 8192
        $region72: #{tpu_custom_call.1} parent=63 // pred_fallthru
          _
        // Predicated region
        $region73: #{tpu_custom_call.1} parent=63 // pred_check
          %p387 = pneg %p237
        $region74: #{tpu_custom_call.1} parent=63 // pred_check_branch
          %389 = sbr.rel (%p387) target = $region76
        $region75: #{tpu_custom_call.1} parent=63 // pred_region
          %390 = dma.done [#allocation6], 2048
        $region76: #{tpu_custom_call.1} parent=63 // pred_fallthru
          _
        %s391 = smul.u32 8, %s27
        %p392 = scmp.lt.s32.totalorder %s391, 23
        %s393 = scalar_select %p392, %s391, 23
        %s394 = smul.addr %s393, 8
        %s395 = scalar_lea.vmem %s0, %s394
        %p396 = pneg %p48
        %p397 = pneg %p45
        %p398 = pneg %p69
        %p399 = pneg %p66
        %p400 = pneg %p90
        %p401 = pneg %p87
        %p402 = pneg %p111
        %p403 = pneg %p108
        %p404 = pneg %p132
        %p405 = pneg %p129
        %p406 = pneg %p153
        %p407 = pneg %p150
        %p408 = pneg %p174
        %p409 = pneg %p171
        %p410 = pneg %p195
        %p411 = pneg %p192
        %p412 = pneg %p216
        %p413 = pneg %p213
        %p414 = pneg %p237
        %p415 = pneg %p234
        %p416 = pneg %p258
        %p417 = pneg %p255
        %p418 = pneg %p284
        %p419 = pneg %p281
        %s420 = sand.u32 %s271, 1
        %s421 = scalar_lea.sflag [#allocation4], %s420
        %s422 = sand.u32 %s271, 1
        %s423 = smul.addr %s422, 64
        %s424 = scalar_lea.vmem [#allocation8], %s423
        %s425 = smul.u32 8, %s27
        %p426 = scmp.lt.s32.totalorder %s425, 23
        %s427 = scalar_select %p426, %s425, 23
        %s428 = smul.addr %s427, 8
        %s429 = scalar_lea.vmem %s0, %s428
        %s430 = smul.u32 8, %s27
        %s431 = smul.u32 8, %s27
        %v432 = vld [vmem:[%s429] sm:$0xff]
        %v433 = vld [vmem:[%s429 + $0x8] sm:$0xff]
        %v434 = vld [vmem:[%s429 + $0x10] sm:$0xff]
        %v435 = vld [vmem:[%s429 + $0x18] sm:$0xff]
        %v436 = vld [vmem:[%s429 + $0x20] sm:$0xff]
        %v437 = vld [vmem:[%s429 + $0x28] sm:$0xff]
        %v438 = vld [vmem:[%s429 + $0x30] sm:$0xff]
        %v439 = vld [vmem:[%s429 + $0x38] sm:$0xff]
        %v440 = vld [vmem:[#allocation2] sm:$0xff]
        %v441 = vld [vmem:[#allocation2 + $0x8] sm:$0xff]
        %v442 = vld [vmem:[#allocation2 + $0x10] sm:$0xff]
        %v443 = vld [vmem:[#allocation2 + $0x18] sm:$0xff]
        %v444 = vld [vmem:[%s2] sm:$0x1]
        %v446 = vlaneseq
        %v447 = vshrl.u32 %v446, 7
        %v448 = vsub.s32 0, %v447
        %v449 = vrot.slane %v444, %v448
        %vm451 = vcmask 261120
        %v453 = vsel %vm451, %v432, 0
        %v456 = vsel %vm451, %v433, 0
        %v459 = vsel %vm451, %v434, 0
        %v462 = vsel %vm451, %v435, 0
        %v465 = vsel %vm451, %v436, 0
        %v468 = vsel %vm451, %v437, 0
        %v471 = vsel %vm451, %v438, 0
        %v474 = vsel %vm451, %v439, 0
        %476 = vmatprep.subr.mxu0 0.0
        %477 = vmatpush1.msra.mxu0 0.0
        %478 = vmatprep.subr.mxu0 0.0
        %479 = vmatpush1.msra.mxu0 0.0
        %480 = vmatprep.subr.mxu0 0.0
        %481 = vmatpush1.msra.mxu0 0.0
        %482 = vmatprep.subr.mxu0 0.0
        %483 = vmatpush1.msra.mxu0 0.0
        %484 = vmatprep.subr.mxu0 0.0
        %485 = vmatpush1.msra.mxu0 0.0
        %486 = vmatprep.subr.mxu0 0.0
        %487 = vmatpush1.msra.mxu0 0.0
        %488 = vmatprep.subr.mxu0 0.0
        %489 = vmatpush1.msra.mxu0 0.0
        %490 = vmatprep.subr.mxu0 0.0
        %491 = vmatpush1.msra.mxu0 0.0
        %492 = vmatprep.subr.mxu0 0.0
        %493 = vmatpush1.msra.mxu0 0.0
        %494 = vmatprep.subr.mxu0 0.0
        %495 = vmatpush1.msra.mxu0 0.0
        %496 = vmatprep.subr.mxu0 0.0
        %497 = vmatpush1.msra.mxu0 0.0
        %498 = vmatprep.subr.mxu0 0.0
        %499 = vmatpush1.msra.mxu0 0.0
        %500 = vmatprep.subr.mxu0 0.0
        %501 = vmatpush1.msra.mxu0 %v443
        %502 = vmatprep.subr.mxu0 0.0
        %503 = vmatpush1.msra.mxu0 %v442
        %504 = vmatprep.subr.mxu0 0.0
        %505 = vmatpush1.msra.mxu0 %v441
        %506 = vmatprep.subr.mxu0 0.0
        %507 = vmatpush1.msra.mxu0 %v440
        %508 = vmatprep.subr.mxu0 0.0
        %509 = vmatpush2.msra.mxu0 0.0
        %510 = vmatprep.subr.mxu0 0.0
        %511 = vmatpush2.msra.mxu0 0.0
        %512 = vmatprep.subr.mxu0 0.0
        %513 = vmatpush2.msra.mxu0 0.0
        %514 = vmatprep.subr.mxu0 0.0
        %515 = vmatpush2.msra.mxu0 0.0
        %516 = vmatprep.subr.mxu0 0.0
        %517 = vmatpush2.msra.mxu0 0.0
        %518 = vmatprep.subr.mxu0 0.0
        %519 = vmatpush2.msra.mxu0 0.0
        %520 = vmatprep.subr.mxu0 0.0
        %521 = vmatpush2.msra.mxu0 0.0
        %522 = vmatprep.subr.mxu0 0.0
        %523 = vmatpush2.msra.mxu0 0.0
        %524 = vmatprep.subr.mxu0 0.0
        %525 = vmatpush2.msra.mxu0 0.0
        %526 = vmatprep.subr.mxu0 0.0
        %527 = vmatpush2.msra.mxu0 0.0
        %528 = vmatprep.subr.mxu0 0.0
        %529 = vmatpush2.msra.mxu0 0.0
        %530 = vmatprep.subr.mxu0 0.0
        %531 = vmatpush2.msra.mxu0 0.0
        %532 = vmatprep.subr.mxu0 0.0
        %533 = vmatpush2.msra.mxu0 0.0
        %534 = vmatprep.subr.mxu0 0.0
        %535 = vmatpush2.msra.mxu0 0.0
        %536 = vmatprep.subr.mxu0 0.0
        %537 = vmatpush2.msra.mxu0 0.0
        %538 = vmatprep.subr.mxu0 0.0
        %539 = vmatpush2.msra.mxu0 0.0
        %540 = vmatprep.mubr.f32.mxu0 0.0
        %541 = vmatmul.mubr.f32.gmra.mxu0 %v453
        %v542 = vpop.f32.mrf.mxu0
        %v543 = vadd.f32 %v449, %v542
        %v544 = vpop.f32.mrf.mxu0
        %545 = vmatprep.mubr.f32.mxu0 0.0
        %546 = vmatmul.mubr.f32.gmra.mxu0 %v456
        %v547 = vpop.f32.mrf.mxu0
        %v548 = vadd.f32 %v449, %v547
        %v549 = vpop.f32.mrf.mxu0
        %550 = vmatprep.mubr.f32.mxu0 0.0
        %551 = vmatmul.mubr.f32.gmra.mxu0 %v459
        %v552 = vpop.f32.mrf.mxu0
        %v553 = vadd.f32 %v449, %v552
        %v554 = vpop.f32.mrf.mxu0
        %555 = vmatprep.mubr.f32.mxu0 0.0
        %556 = vmatmul.mubr.f32.gmra.mxu0 %v462
        %v557 = vpop.f32.mrf.mxu0
        %v558 = vadd.f32 %v449, %v557
        %v559 = vpop.f32.mrf.mxu0
        %560 = vmatprep.mubr.f32.mxu0 0.0
        %561 = vmatmul.mubr.f32.gmra.mxu0 %v465
        %v562 = vpop.f32.mrf.mxu0
        %v563 = vadd.f32 %v449, %v562
        %v564 = vpop.f32.mrf.mxu0
        %565 = vmatprep.mubr.f32.mxu0 0.0
        %566 = vmatmul.mubr.f32.gmra.mxu0 %v468
        %v567 = vpop.f32.mrf.mxu0
        %v568 = vadd.f32 %v449, %v567
        %v569 = vpop.f32.mrf.mxu0
        %570 = vmatprep.mubr.f32.mxu0 0.0
        %571 = vmatmul.mubr.f32.gmra.mxu0 %v471
        %v572 = vpop.f32.mrf.mxu0
        %v573 = vadd.f32 %v449, %v572
        %v574 = vpop.f32.mrf.mxu0
        %575 = vmatprep.mubr.f32.mxu0 0.0
        %576 = vmatmul.mubr.f32.gmra.mxu0 %v474
        %v577 = vpop.f32.mrf.mxu0
        %v578 = vadd.f32 %v449, %v577
        %v579 = vpop.f32.mrf.mxu0
        %580 = vdwg.mxu0
        %v581 = vmax.f32 %v543, 0.0
        %v582 = vmax.f32 %v548, 0.0
        %v583 = vmax.f32 %v553, 0.0
        %v584 = vmax.f32 %v558, 0.0
        %v585 = vmax.f32 %v563, 0.0
        %v586 = vmax.f32 %v568, 0.0
        %v587 = vmax.f32 %v573, 0.0
        %v588 = vmax.f32 %v578, 0.0
        %589 = vadd.xlane.f32.xlu0 %v581
        %v590 = vpop.xlane.xlu0 %589
        %591 = vadd.xlane.f32.xlu0 %v582
        %v592 = vpop.xlane.xlu0 %591
        %593 = vadd.xlane.f32.xlu0 %v583
        %v594 = vpop.xlane.xlu0 %593
        %595 = vadd.xlane.f32.xlu0 %v584
        %v596 = vpop.xlane.xlu0 %595
        %597 = vadd.xlane.f32.xlu0 %v585
        %v598 = vpop.xlane.xlu0 %597
        %599 = vadd.xlane.f32.xlu0 %v586
        %v600 = vpop.xlane.xlu0 %599
        %601 = vadd.xlane.f32.xlu0 %v587
        %v602 = vpop.xlane.xlu0 %601
        %603 = vadd.xlane.f32.xlu0 %v588
        %v604 = vpop.xlane.xlu0 %603
        %v605 = vmul.f32 %v581, %v581
        %v606 = vmul.f32 %v582, %v582
        %v607 = vmul.f32 %v583, %v583
        %v608 = vmul.f32 %v584, %v584
        %v609 = vmul.f32 %v585, %v585
        %v610 = vmul.f32 %v586, %v586
        %v611 = vmul.f32 %v587, %v587
        %v612 = vmul.f32 %v588, %v588
        %613 = vadd.xlane.f32.xlu0 %v605
        %v614 = vpop.xlane.xlu0 %613
        %615 = vadd.xlane.f32.xlu0 %v606
        %v616 = vpop.xlane.xlu0 %615
        %617 = vadd.xlane.f32.xlu0 %v607
        %v618 = vpop.xlane.xlu0 %617
        %619 = vadd.xlane.f32.xlu0 %v608
        %v620 = vpop.xlane.xlu0 %619
        %621 = vadd.xlane.f32.xlu0 %v609
        %v622 = vpop.xlane.xlu0 %621
        %623 = vadd.xlane.f32.xlu0 %v610
        %v624 = vpop.xlane.xlu0 %623
        %625 = vadd.xlane.f32.xlu0 %v611
        %v626 = vpop.xlane.xlu0 %625
        %627 = vadd.xlane.f32.xlu0 %v612
        %v628 = vpop.xlane.xlu0 %627
        %v629 = vmul.f32 %v590, 0.01
        %v630 = vmul.f32 %v592, 0.01
        %v631 = vmul.f32 %v594, 0.01
        %v632 = vmul.f32 %v596, 0.01
        %v633 = vmul.f32 %v598, 0.01
        %v634 = vmul.f32 %v600, 0.01
        %v635 = vmul.f32 %v602, 0.01
        %v636 = vmul.f32 %v604, 0.01
        %v637 = vmul.f32 %v614, 0.01
        %v638 = vmul.f32 %v616, 0.01
        %v639 = vmul.f32 %v618, 0.01
        %v640 = vmul.f32 %v620, 0.01
        %v641 = vmul.f32 %v622, 0.01
        %v642 = vmul.f32 %v624, 0.01
        %v643 = vmul.f32 %v626, 0.01
        %v644 = vmul.f32 %v628, 0.01
        %v645 = vmul.f32 %v629, %v629
        %v646 = vmul.f32 %v630, %v630
        %v647 = vmul.f32 %v631, %v631
        %v648 = vmul.f32 %v632, %v632
        %v649 = vmul.f32 %v633, %v633
        %v650 = vmul.f32 %v634, %v634
        %v651 = vmul.f32 %v635, %v635
        %v652 = vmul.f32 %v636, %v636
        %v653 = vsub.f32 %v637, %v645
        %v654 = vsub.f32 %v638, %v646
        %v655 = vsub.f32 %v639, %v647
        %v656 = vsub.f32 %v640, %v648
        %v657 = vsub.f32 %v641, %v649
        %v658 = vsub.f32 %v642, %v650
        %v659 = vsub.f32 %v643, %v651
        %v660 = vsub.f32 %v644, %v652
        %v661 = vadd.f32 %v653, 1e-05
        %v662 = vadd.f32 %v654, 1e-05
        %v663 = vadd.f32 %v655, 1e-05
        %v664 = vadd.f32 %v656, 1e-05
        %v665 = vadd.f32 %v657, 1e-05
        %v666 = vadd.f32 %v658, 1e-05
        %v667 = vadd.f32 %v659, 1e-05
        %v668 = vadd.f32 %v660, 1e-05
        %v669 = vrsqrt.pop %v661
        %v670 = vrsqrt.pop %v662
        %v671 = vrsqrt.pop %v663
        %v672 = vrsqrt.pop %v664
        %v673 = vrsqrt.pop %v665
        %v674 = vrsqrt.pop %v666
        %v675 = vrsqrt.pop %v667
        %v676 = vrsqrt.pop %v668
        %v677 = vsub.f32 %v581, %v629
        %v678 = vsub.f32 %v582, %v630
        %v679 = vsub.f32 %v583, %v631
        %v680 = vsub.f32 %v584, %v632
        %v681 = vsub.f32 %v585, %v633
        %v682 = vsub.f32 %v586, %v634
        %v683 = vsub.f32 %v587, %v635
        %v684 = vsub.f32 %v588, %v636
        %v685 = vmul.f32 %v677, %v669
        %v686 = vmul.f32 %v678, %v670
        %v687 = vmul.f32 %v679, %v671
        %v688 = vmul.f32 %v680, %v672
        %v689 = vmul.f32 %v681, %v673
        %v690 = vmul.f32 %v682, %v674
        %v691 = vmul.f32 %v683, %v675
        %v692 = vmul.f32 %v684, %v676
        %v693 = vld [vmem:[%s3] sm:$0x1]
        %v695 = vlaneseq
        %v696 = vshrl.u32 %v695, 7
        %v697 = vsub.s32 0, %v696
        %v698 = vrot.slane %v693, %v697
        %v700 = vmul.f32 %v685, %v698
        %v701 = vmul.f32 %v686, %v698
        %v702 = vmul.f32 %v687, %v698
        %v703 = vmul.f32 %v688, %v698
        %v704 = vmul.f32 %v689, %v698
        %v705 = vmul.f32 %v690, %v698
        %v706 = vmul.f32 %v691, %v698
        %v707 = vmul.f32 %v692, %v698
        %v708 = vld [vmem:[%s4] sm:$0x1]
        %v710 = vlaneseq
        %v711 = vshrl.u32 %v710, 7
        %v712 = vsub.s32 0, %v711
        %v713 = vrot.slane %v708, %v712
        %v715 = vadd.f32 %v700, %v713
        %v716 = vadd.f32 %v701, %v713
        %v717 = vadd.f32 %v702, %v713
        %v718 = vadd.f32 %v703, %v713
        %v719 = vadd.f32 %v704, %v713
        %v720 = vadd.f32 %v705, %v713
        %v721 = vadd.f32 %v706, %v713
        %v722 = vadd.f32 %v707, %v713
        %v723 = vld [vmem:[#allocation5] sm:$0xff]
        %v724 = vld [vmem:[#allocation5 + $0x8] sm:$0xff]
        %v725 = vld [vmem:[#allocation5 + $0x10] sm:$0xff]
        %v726 = vld [vmem:[#allocation5 + $0x18] sm:$0xff]
        %v727 = vld [vmem:[#allocation5 + $0x20] sm:$0xff]
        %v728 = vld [vmem:[#allocation5 + $0x28] sm:$0xff]
        %v729 = vld [vmem:[#allocation5 + $0x30] sm:$0xff]
        %v730 = vld [vmem:[#allocation5 + $0x38] sm:$0xff]
        %v731 = vld [vmem:[#allocation5 + $0x40] sm:$0xff]
        %v732 = vld [vmem:[#allocation5 + $0x48] sm:$0xff]
        %v733 = vld [vmem:[#allocation5 + $0x50] sm:$0xff]
        %v734 = vld [vmem:[#allocation5 + $0x58] sm:$0xff]
        %v735 = vld [vmem:[#allocation5 + $0x60] sm:$0xff]
        %v736 = vld [vmem:[#allocation5 + $0x68] sm:$0xff]
        %v737 = vld [vmem:[#allocation5 + $0x70] sm:$0xff]
        %v738 = vld [vmem:[#allocation5 + $0x78] sm:$0xff]
        %v739 = vld [vmem:[#allocation5 + $0x80] sm:$0xff]
        %v740 = vld [vmem:[#allocation5 + $0x88] sm:$0xff]
        %v741 = vld [vmem:[#allocation5 + $0x90] sm:$0xff]
        %v742 = vld [vmem:[#allocation5 + $0x98] sm:$0xff]
        %v743 = vld [vmem:[#allocation5 + $0xa0] sm:$0xff]
        %v744 = vld [vmem:[#allocation5 + $0xa8] sm:$0xff]
        %v745 = vld [vmem:[#allocation5 + $0xb0] sm:$0xff]
        %v746 = vld [vmem:[#allocation5 + $0xb8] sm:$0xff]
        %v747 = vld [vmem:[#allocation5 + $0xc0] sm:$0xff]
        %v748 = vld [vmem:[#allocation5 + $0xc8] sm:$0xff]
        %v749 = vld [vmem:[#allocation5 + $0xd0] sm:$0xff]
        %v750 = vld [vmem:[#allocation5 + $0xd8] sm:$0xff]
        %v751 = vld [vmem:[#allocation5 + $0xe0] sm:$0xff]
        %v752 = vld [vmem:[#allocation5 + $0xe8] sm:$0xff]
        %v753 = vld [vmem:[#allocation5 + $0xf0] sm:$0xff]
        %v754 = vld [vmem:[#allocation5 + $0xf8] sm:$0xff]
        %v755 = vld [vmem:[#allocation5 + $0x100] sm:$0xff]
        %v756 = vld [vmem:[#allocation5 + $0x108] sm:$0xff]
        %v757 = vld [vmem:[#allocation5 + $0x110] sm:$0xff]
        %v758 = vld [vmem:[#allocation5 + $0x118] sm:$0xff]
        %v759 = vld [vmem:[#allocation5 + $0x120] sm:$0xff]
        %v760 = vld [vmem:[#allocation5 + $0x128] sm:$0xff]
        %v761 = vld [vmem:[#allocation5 + $0x130] sm:$0xff]
        %v762 = vld [vmem:[#allocation5 + $0x138] sm:$0xff]
        %v763 = vld [vmem:[#allocation5 + $0x140] sm:$0xff]
        %v764 = vld [vmem:[#allocation5 + $0x148] sm:$0xff]
        %v765 = vld [vmem:[#allocation5 + $0x150] sm:$0xff]
        %v766 = vld [vmem:[#allocation5 + $0x158] sm:$0xff]
        %v767 = vld [vmem:[#allocation5 + $0x160] sm:$0xff]
        %v768 = vld [vmem:[#allocation5 + $0x168] sm:$0xff]
        %v769 = vld [vmem:[#allocation5 + $0x170] sm:$0xff]
        %v770 = vld [vmem:[#allocation5 + $0x178] sm:$0xff]
        %v771 = vld [vmem:[#allocation5 + $0x180] sm:$0xff]
        %v772 = vld [vmem:[#allocation5 + $0x188] sm:$0xff]
        %v773 = vld [vmem:[#allocation5 + $0x190] sm:$0xff]
        %v774 = vld [vmem:[#allocation5 + $0x198] sm:$0xff]
        %v775 = vld [vmem:[#allocation5 + $0x1a0] sm:$0xff]
        %v776 = vld [vmem:[#allocation5 + $0x1a8] sm:$0xff]
        %v777 = vld [vmem:[#allocation5 + $0x1b0] sm:$0xff]
        %v778 = vld [vmem:[#allocation5 + $0x1b8] sm:$0xff]
        %v779 = vld [vmem:[#allocation5 + $0x1c0] sm:$0xff]
        %v780 = vld [vmem:[#allocation5 + $0x1c8] sm:$0xff]
        %v781 = vld [vmem:[#allocation5 + $0x1d0] sm:$0xff]
        %v782 = vld [vmem:[#allocation5 + $0x1d8] sm:$0xff]
        %v783 = vld [vmem:[#allocation5 + $0x1e0] sm:$0xff]
        %v784 = vld [vmem:[#allocation5 + $0x1e8] sm:$0xff]
        %v785 = vld [vmem:[#allocation5 + $0x1f0] sm:$0xff]
        %v786 = vld [vmem:[#allocation5 + $0x1f8] sm:$0xff]
        %v787 = vld [vmem:[%s6] sm:$0xf]
        %v789 = vlaneseq
        %v790 = vshrl.u32 %v789, 7
        %v791 = vsub.s32 0, %v790
        %v792 = vrot.slane %v787, %v791
        %v793 = vlaneseq
        %v794 = vshrl.u32 %v793, 7
        %v795 = vsub.s32 1, %v794
        %v796 = vrot.slane %v787, %v795
        %v797 = vlaneseq
        %v798 = vshrl.u32 %v797, 7
        %v799 = vsub.s32 2, %v798
        %v800 = vrot.slane %v787, %v799
        %v801 = vlaneseq
        %v802 = vshrl.u32 %v801, 7
        %v803 = vsub.s32 3, %v802
        %v804 = vrot.slane %v787, %v803
        %809 = vmatprep.subr.mxu0 %v784
        %810 = vmatpush1.msra.mxu0 %v783
        %811 = vmatprep.subr.mxu0 %v780
        %812 = vmatpush1.msra.mxu0 %v779
        %813 = vmatprep.subr.mxu0 %v776
        %814 = vmatpush1.msra.mxu0 %v775
        %815 = vmatprep.subr.mxu0 %v772
        %816 = vmatpush1.msra.mxu0 %v771
        %817 = vmatprep.subr.mxu0 %v768
        %818 = vmatpush1.msra.mxu0 %v767
        %819 = vmatprep.subr.mxu0 %v764
        %820 = vmatpush1.msra.mxu0 %v763
        %821 = vmatprep.subr.mxu0 %v760
        %822 = vmatpush1.msra.mxu0 %v759
        %823 = vmatprep.subr.mxu0 %v756
        %824 = vmatpush1.msra.mxu0 %v755
        %825 = vmatprep.subr.mxu0 %v752
        %826 = vmatpush1.msra.mxu0 %v751
        %827 = vmatprep.subr.mxu0 %v748
        %828 = vmatpush1.msra.mxu0 %v747
        %829 = vmatprep.subr.mxu0 %v744
        %830 = vmatpush1.msra.mxu0 %v743
        %831 = vmatprep.subr.mxu0 %v740
        %832 = vmatpush1.msra.mxu0 %v739
        %833 = vmatprep.subr.mxu0 %v736
        %834 = vmatpush1.msra.mxu0 %v735
        %835 = vmatprep.subr.mxu0 %v732
        %836 = vmatpush1.msra.mxu0 %v731
        %837 = vmatprep.subr.mxu0 %v728
        %838 = vmatpush1.msra.mxu0 %v727
        %839 = vmatprep.subr.mxu0 %v724
        %840 = vmatpush1.msra.mxu0 %v723
        %841 = vmatprep.subr.mxu0 0.0
        %842 = vmatpush2.msra.mxu0 0.0
        %843 = vmatprep.subr.mxu0 0.0
        %844 = vmatpush2.msra.mxu0 0.0
        %845 = vmatprep.subr.mxu0 0.0
        %846 = vmatpush2.msra.mxu0 0.0
        %847 = vmatprep.subr.mxu0 0.0
        %848 = vmatpush2.msra.mxu0 0.0
        %849 = vmatprep.subr.mxu0 0.0
        %850 = vmatpush2.msra.mxu0 0.0
        %851 = vmatprep.subr.mxu0 0.0
        %852 = vmatpush2.msra.mxu0 0.0
        %853 = vmatprep.subr.mxu0 0.0
        %854 = vmatpush2.msra.mxu0 0.0
        %855 = vmatprep.subr.mxu0 0.0
        %856 = vmatpush2.msra.mxu0 0.0
        %857 = vmatprep.subr.mxu0 0.0
        %858 = vmatpush2.msra.mxu0 0.0
        %859 = vmatprep.subr.mxu0 0.0
        %860 = vmatpush2.msra.mxu0 0.0
        %861 = vmatprep.subr.mxu0 0.0
        %862 = vmatpush2.msra.mxu0 0.0
        %863 = vmatprep.subr.mxu0 0.0
        %864 = vmatpush2.msra.mxu0 0.0
        %865 = vmatprep.subr.mxu0 0.0
        %866 = vmatpush2.msra.mxu0 0.0
        %867 = vmatprep.subr.mxu0 0.0
        %868 = vmatpush2.msra.mxu0 0.0
        %869 = vmatprep.subr.mxu0 0.0
        %870 = vmatpush2.msra.mxu0 0.0
        %871 = vmatprep.subr.mxu0 0.0
        %872 = vmatpush2.msra.mxu0 0.0
        %873 = vmatprep.mubr.f32.mxu0 0.0
        %874 = vmatmul.mubr.f32.gmra.mxu0 %v715
        %v875 = vpop.f32.mrf.mxu0
        %v876 = vadd.f32 %v792, %v875
        %v877 = vpop.f32.mrf.mxu0
        %v878 = vadd.f32 %v796, %v877
        %879 = vmatprep.mubr.f32.mxu0 0.0
        %880 = vmatmul.mubr.f32.gmra.mxu0 %v716
        %v881 = vpop.f32.mrf.mxu0
        %v882 = vadd.f32 %v792, %v881
        %v883 = vpop.f32.mrf.mxu0
        %v884 = vadd.f32 %v796, %v883
        %885 = vmatprep.mubr.f32.mxu0 0.0
        %886 = vmatmul.mubr.f32.gmra.mxu0 %v717
        %v887 = vpop.f32.mrf.mxu0
        %v888 = vadd.f32 %v792, %v887
        %v889 = vpop.f32.mrf.mxu0
        %v890 = vadd.f32 %v796, %v889
        %891 = vmatprep.mubr.f32.mxu0 0.0
        %892 = vmatmul.mubr.f32.gmra.mxu0 %v718
        %v893 = vpop.f32.mrf.mxu0
        %v894 = vadd.f32 %v792, %v893
        %v895 = vpop.f32.mrf.mxu0
        %v896 = vadd.f32 %v796, %v895
        %897 = vmatprep.mubr.f32.mxu0 0.0
        %898 = vmatmul.mubr.f32.gmra.mxu0 %v719
        %v899 = vpop.f32.mrf.mxu0
        %v900 = vadd.f32 %v792, %v899
        %v901 = vpop.f32.mrf.mxu0
        %v902 = vadd.f32 %v796, %v901
        %903 = vmatprep.mubr.f32.mxu0 0.0
        %904 = vmatmul.mubr.f32.gmra.mxu0 %v720
        %v905 = vpop.f32.mrf.mxu0
        %v906 = vadd.f32 %v792, %v905
        %v907 = vpop.f32.mrf.mxu0
        %v908 = vadd.f32 %v796, %v907
        %909 = vmatprep.mubr.f32.mxu0 0.0
        %910 = vmatmul.mubr.f32.gmra.mxu0 %v721
        %v911 = vpop.f32.mrf.mxu0
        %v912 = vadd.f32 %v792, %v911
        %v913 = vpop.f32.mrf.mxu0
        %v914 = vadd.f32 %v796, %v913
        %915 = vmatprep.mubr.f32.mxu0 0.0
        %916 = vmatmul.mubr.f32.gmra.mxu0 %v722
        %v917 = vpop.f32.mrf.mxu0
        %v918 = vadd.f32 %v792, %v917
        %v919 = vpop.f32.mrf.mxu0
        %v920 = vadd.f32 %v796, %v919
        %921 = vdwg.mxu0
        %922 = vmatprep.subr.mxu0 %v786
        %923 = vmatpush1.msra.mxu0 %v785
        %924 = vmatprep.subr.mxu0 %v782
        %925 = vmatpush1.msra.mxu0 %v781
        %926 = vmatprep.subr.mxu0 %v778
        %927 = vmatpush1.msra.mxu0 %v777
        %928 = vmatprep.subr.mxu0 %v774
        %929 = vmatpush1.msra.mxu0 %v773
        %930 = vmatprep.subr.mxu0 %v770
        %931 = vmatpush1.msra.mxu0 %v769
        %932 = vmatprep.subr.mxu0 %v766
        %933 = vmatpush1.msra.mxu0 %v765
        %934 = vmatprep.subr.mxu0 %v762
        %935 = vmatpush1.msra.mxu0 %v761
        %936 = vmatprep.subr.mxu0 %v758
        %937 = vmatpush1.msra.mxu0 %v757
        %938 = vmatprep.subr.mxu0 %v754
        %939 = vmatpush1.msra.mxu0 %v753
        %940 = vmatprep.subr.mxu0 %v750
        %941 = vmatpush1.msra.mxu0 %v749
        %942 = vmatprep.subr.mxu0 %v746
        %943 = vmatpush1.msra.mxu0 %v745
        %944 = vmatprep.subr.mxu0 %v742
        %945 = vmatpush1.msra.mxu0 %v741
        %946 = vmatprep.subr.mxu0 %v738
        %947 = vmatpush1.msra.mxu0 %v737
        %948 = vmatprep.subr.mxu0 %v734
        %949 = vmatpush1.msra.mxu0 %v733
        %950 = vmatprep.subr.mxu0 %v730
        %951 = vmatpush1.msra.mxu0 %v729
        %952 = vmatprep.subr.mxu0 %v726
        %953 = vmatpush1.msra.mxu0 %v725
        %954 = vmatprep.subr.mxu0 0.0
        %955 = vmatpush2.msra.mxu0 0.0
        %956 = vmatprep.subr.mxu0 0.0
        %957 = vmatpush2.msra.mxu0 0.0
        %958 = vmatprep.subr.mxu0 0.0
        %959 = vmatpush2.msra.mxu0 0.0
        %960 = vmatprep.subr.mxu0 0.0
        %961 = vmatpush2.msra.mxu0 0.0
        %962 = vmatprep.subr.mxu0 0.0
        %963 = vmatpush2.msra.mxu0 0.0
        %964 = vmatprep.subr.mxu0 0.0
        %965 = vmatpush2.msra.mxu0 0.0
        %966 = vmatprep.subr.mxu0 0.0
        %967 = vmatpush2.msra.mxu0 0.0
        %968 = vmatprep.subr.mxu0 0.0
        %969 = vmatpush2.msra.mxu0 0.0
        %970 = vmatprep.subr.mxu0 0.0
        %971 = vmatpush2.msra.mxu0 0.0
        %972 = vmatprep.subr.mxu0 0.0
        %973 = vmatpush2.msra.mxu0 0.0
        %974 = vmatprep.subr.mxu0 0.0
        %975 = vmatpush2.msra.mxu0 0.0
        %976 = vmatprep.subr.mxu0 0.0
        %977 = vmatpush2.msra.mxu0 0.0
        %978 = vmatprep.subr.mxu0 0.0
        %979 = vmatpush2.msra.mxu0 0.0
        %980 = vmatprep.subr.mxu0 0.0
        %981 = vmatpush2.msra.mxu0 0.0
        %982 = vmatprep.subr.mxu0 0.0
        %983 = vmatpush2.msra.mxu0 0.0
        %984 = vmatprep.subr.mxu0 0.0
        %985 = vmatpush2.msra.mxu0 0.0
        %986 = vmatprep.mubr.f32.mxu0 0.0
        %987 = vmatmul.mubr.f32.gmra.mxu0 %v715
        %v988 = vpop.f32.mrf.mxu0
        %v989 = vadd.f32 %v800, %v988
        %v990 = vpop.f32.mrf.mxu0
        %v991 = vadd.f32 %v804, %v990
        %992 = vmatprep.mubr.f32.mxu0 0.0
        %993 = vmatmul.mubr.f32.gmra.mxu0 %v716
        %v994 = vpop.f32.mrf.mxu0
        %v995 = vadd.f32 %v800, %v994
        %v996 = vpop.f32.mrf.mxu0
        %v997 = vadd.f32 %v804, %v996
        %998 = vmatprep.mubr.f32.mxu0 0.0
        %999 = vmatmul.mubr.f32.gmra.mxu0 %v717
        %v1000 = vpop.f32.mrf.mxu0
        %v1001 = vadd.f32 %v800, %v1000
        %v1002 = vpop.f32.mrf.mxu0
        %v1003 = vadd.f32 %v804, %v1002
        %1004 = vmatprep.mubr.f32.mxu0 0.0
        %1005 = vmatmul.mubr.f32.gmra.mxu0 %v718
        %v1006 = vpop.f32.mrf.mxu0
        %v1007 = vadd.f32 %v800, %v1006
        %v1008 = vpop.f32.mrf.mxu0
        %v1009 = vadd.f32 %v804, %v1008
        %1010 = vmatprep.mubr.f32.mxu0 0.0
        %1011 = vmatmul.mubr.f32.gmra.mxu0 %v719
        %v1012 = vpop.f32.mrf.mxu0
        %v1013 = vadd.f32 %v800, %v1012
        %v1014 = vpop.f32.mrf.mxu0
        %v1015 = vadd.f32 %v804, %v1014
        %1016 = vmatprep.mubr.f32.mxu0 0.0
        %1017 = vmatmul.mubr.f32.gmra.mxu0 %v720
        %v1018 = vpop.f32.mrf.mxu0
        %v1019 = vadd.f32 %v800, %v1018
        %v1020 = vpop.f32.mrf.mxu0
        %v1021 = vadd.f32 %v804, %v1020
        %1022 = vmatprep.mubr.f32.mxu0 0.0
        %1023 = vmatmul.mubr.f32.gmra.mxu0 %v721
        %v1024 = vpop.f32.mrf.mxu0
        %v1025 = vadd.f32 %v800, %v1024
        %v1026 = vpop.f32.mrf.mxu0
        %v1027 = vadd.f32 %v804, %v1026
        %1028 = vmatprep.mubr.f32.mxu0 0.0
        %1029 = vmatmul.mubr.f32.gmra.mxu0 %v722
        %v1030 = vpop.f32.mrf.mxu0
        %v1031 = vadd.f32 %v800, %v1030
        %v1032 = vpop.f32.mrf.mxu0
        %v1033 = vadd.f32 %v804, %v1032
        %1034 = vdwg.mxu0
        %v1035 = vmax.f32 %v876, 0.0
        %v1036 = vmax.f32 %v878, 0.0
        %v1037 = vmax.f32 %v989, 0.0
        %v1038 = vmax.f32 %v991, 0.0
        %v1039 = vmax.f32 %v882, 0.0
        %v1040 = vmax.f32 %v884, 0.0
        %v1041 = vmax.f32 %v995, 0.0
        %v1042 = vmax.f32 %v997, 0.0
        %v1043 = vmax.f32 %v888, 0.0
        %v1044 = vmax.f32 %v890, 0.0
        %v1045 = vmax.f32 %v1001, 0.0
        %v1046 = vmax.f32 %v1003, 0.0
        %v1047 = vmax.f32 %v894, 0.0
        %v1048 = vmax.f32 %v896, 0.0
        %v1049 = vmax.f32 %v1007, 0.0
        %v1050 = vmax.f32 %v1009, 0.0
        %v1051 = vmax.f32 %v900, 0.0
        %v1052 = vmax.f32 %v902, 0.0
        %v1053 = vmax.f32 %v1013, 0.0
        %v1054 = vmax.f32 %v1015, 0.0
        %v1055 = vmax.f32 %v906, 0.0
        %v1056 = vmax.f32 %v908, 0.0
        %v1057 = vmax.f32 %v1019, 0.0
        %v1058 = vmax.f32 %v1021, 0.0
        %v1059 = vmax.f32 %v912, 0.0
        %v1060 = vmax.f32 %v914, 0.0
        %v1061 = vmax.f32 %v1025, 0.0
        %v1062 = vmax.f32 %v1027, 0.0
        %v1063 = vmax.f32 %v918, 0.0
        %v1064 = vmax.f32 %v920, 0.0
        %v1065 = vmax.f32 %v1031, 0.0
        %v1066 = vmax.f32 %v1033, 0.0
        %v1067 = vadd.f32 %v1035, %v1037
        %v1068 = vadd.f32 %v1036, %v1038
        %v1069 = vadd.f32 %v1039, %v1041
        %v1070 = vadd.f32 %v1040, %v1042
        %v1071 = vadd.f32 %v1043, %v1045
        %v1072 = vadd.f32 %v1044, %v1046
        %v1073 = vadd.f32 %v1047, %v1049
        %v1074 = vadd.f32 %v1048, %v1050
        %v1075 = vadd.f32 %v1051, %v1053
        %v1076 = vadd.f32 %v1052, %v1054
        %v1077 = vadd.f32 %v1055, %v1057
        %v1078 = vadd.f32 %v1056, %v1058
        %v1079 = vadd.f32 %v1059, %v1061
        %v1080 = vadd.f32 %v1060, %v1062
        %v1081 = vadd.f32 %v1063, %v1065
        %v1082 = vadd.f32 %v1064, %v1066
        %v1083 = vld [vmem:[%s7] sm:$0xff]
        %v1084 = vld [vmem:[%s7 + $0x8] sm:$0xff]
        %v1085 = vld [vmem:[%s7 + $0x10] sm:$0xff]
        %v1086 = vld [vmem:[%s7 + $0x18] sm:$0xff]
        %v1087 = vld [vmem:[%s7 + $0x20] sm:$0xff]
        %v1088 = vld [vmem:[%s7 + $0x28] sm:$0xff]
        %v1089 = vld [vmem:[%s7 + $0x30] sm:$0xff]
        %v1090 = vld [vmem:[%s7 + $0x38] sm:$0xff]
        %v1091 = vld [vmem:[%s7 + $0x40] sm:$0xff]
        %v1092 = vld [vmem:[%s7 + $0x48] sm:$0xff]
        %v1093 = vld [vmem:[%s7 + $0x50] sm:$0xff]
        %v1094 = vld [vmem:[%s7 + $0x58] sm:$0xff]
        %v1095 = vld [vmem:[%s7 + $0x60] sm:$0xff]
        %v1096 = vld [vmem:[%s7 + $0x68] sm:$0xff]
        %v1097 = vld [vmem:[%s7 + $0x70] sm:$0xff]
        %v1098 = vld [vmem:[%s7 + $0x78] sm:$0xff]
        %v1099 = vld [vmem:[%s7 + $0x80] sm:$0xff]
        %v1100 = vld [vmem:[%s7 + $0x88] sm:$0xff]
        %v1101 = vld [vmem:[%s7 + $0x90] sm:$0xff]
        %v1102 = vld [vmem:[%s7 + $0x98] sm:$0xff]
        %v1103 = vld [vmem:[%s7 + $0xa0] sm:$0xff]
        %v1104 = vld [vmem:[%s7 + $0xa8] sm:$0xff]
        %v1105 = vld [vmem:[%s7 + $0xb0] sm:$0xff]
        %v1106 = vld [vmem:[%s7 + $0xb8] sm:$0xff]
        %v1107 = vld [vmem:[%s7 + $0xc0] sm:$0xff]
        %v1108 = vld [vmem:[%s7 + $0xc8] sm:$0xff]
        %v1109 = vld [vmem:[%s7 + $0xd0] sm:$0xff]
        %v1110 = vld [vmem:[%s7 + $0xd8] sm:$0xff]
        %v1111 = vld [vmem:[%s7 + $0xe0] sm:$0xff]
        %v1112 = vld [vmem:[%s7 + $0xe8] sm:$0xff]
        %v1113 = vld [vmem:[%s7 + $0xf0] sm:$0xff]
        %v1114 = vld [vmem:[%s7 + $0xf8] sm:$0xff]
        %v1115 = vld [vmem:[%s8] sm:$0x1]
        %v1117 = vlaneseq
        %v1118 = vshrl.u32 %v1117, 7
        %v1119 = vsub.s32 0, %v1118
        %v1120 = vrot.slane %v1115, %v1119
        %1122 = vmatprep.subr.mxu0 0.0
        %1123 = vmatpush1.msra.mxu0 %v1098
        %1124 = vmatprep.subr.mxu0 0.0
        %1125 = vmatpush1.msra.mxu0 %v1097
        %1126 = vmatprep.subr.mxu0 0.0
        %1127 = vmatpush1.msra.mxu0 %v1096
        %1128 = vmatprep.subr.mxu0 0.0
        %1129 = vmatpush1.msra.mxu0 %v1095
        %1130 = vmatprep.subr.mxu0 0.0
        %1131 = vmatpush1.msra.mxu0 %v1094
        %1132 = vmatprep.subr.mxu0 0.0
        %1133 = vmatpush1.msra.mxu0 %v1093
        %1134 = vmatprep.subr.mxu0 0.0
        %1135 = vmatpush1.msra.mxu0 %v1092
        %1136 = vmatprep.subr.mxu0 0.0
        %1137 = vmatpush1.msra.mxu0 %v1091
        %1138 = vmatprep.subr.mxu0 0.0
        %1139 = vmatpush1.msra.mxu0 %v1090
        %1140 = vmatprep.subr.mxu0 0.0
        %1141 = vmatpush1.msra.mxu0 %v1089
        %1142 = vmatprep.subr.mxu0 0.0
        %1143 = vmatpush1.msra.mxu0 %v1088
        %1144 = vmatprep.subr.mxu0 0.0
        %1145 = vmatpush1.msra.mxu0 %v1087
        %1146 = vmatprep.subr.mxu0 0.0
        %1147 = vmatpush1.msra.mxu0 %v1086
        %1148 = vmatprep.subr.mxu0 0.0
        %1149 = vmatpush1.msra.mxu0 %v1085
        %1150 = vmatprep.subr.mxu0 0.0
        %1151 = vmatpush1.msra.mxu0 %v1084
        %1152 = vmatprep.subr.mxu0 0.0
        %1153 = vmatpush1.msra.mxu0 %v1083
        %1154 = vmatprep.subr.mxu0 0.0
        %1155 = vmatpush2.msra.mxu0 %v1114
        %1156 = vmatprep.subr.mxu0 0.0
        %1157 = vmatpush2.msra.mxu0 %v1113
        %1158 = vmatprep.subr.mxu0 0.0
        %1159 = vmatpush2.msra.mxu0 %v1112
        %1160 = vmatprep.subr.mxu0 0.0
        %1161 = vmatpush2.msra.mxu0 %v1111
        %1162 = vmatprep.subr.mxu0 0.0
        %1163 = vmatpush2.msra.mxu0 %v1110
        %1164 = vmatprep.subr.mxu0 0.0
        %1165 = vmatpush2.msra.mxu0 %v1109
        %1166 = vmatprep.subr.mxu0 0.0
        %1167 = vmatpush2.msra.mxu0 %v1108
        %1168 = vmatprep.subr.mxu0 0.0
        %1169 = vmatpush2.msra.mxu0 %v1107
        %1170 = vmatprep.subr.mxu0 0.0
        %1171 = vmatpush2.msra.mxu0 %v1106
        %1172 = vmatprep.subr.mxu0 0.0
        %1173 = vmatpush2.msra.mxu0 %v1105
        %1174 = vmatprep.subr.mxu0 0.0
        %1175 = vmatpush2.msra.mxu0 %v1104
        %1176 = vmatprep.subr.mxu0 0.0
        %1177 = vmatpush2.msra.mxu0 %v1103
        %1178 = vmatprep.subr.mxu0 0.0
        %1179 = vmatpush2.msra.mxu0 %v1102
        %1180 = vmatprep.subr.mxu0 0.0
        %1181 = vmatpush2.msra.mxu0 %v1101
        %1182 = vmatprep.subr.mxu0 0.0
        %1183 = vmatpush2.msra.mxu0 %v1100
        %1184 = vmatprep.subr.mxu0 0.0
        %1185 = vmatpush2.msra.mxu0 %v1099
        %1186 = vmatprep.mubr.f32.mxu0 %v1068
        %1187 = vmatmul.mubr.f32.gmra.mxu0 %v1067
        %v1188 = vpop.f32.mrf.mxu0
        %v1189 = vadd.f32 %v1120, %v1188
        %v1190 = vpop.f32.mrf.mxu0
        %1191 = vmatprep.mubr.f32.mxu0 %v1070
        %1192 = vmatmul.mubr.f32.gmra.mxu0 %v1069
        %v1193 = vpop.f32.mrf.mxu0
        %v1194 = vadd.f32 %v1120, %v1193
        %v1195 = vpop.f32.mrf.mxu0
        %1196 = vmatprep.mubr.f32.mxu0 %v1072
        %1197 = vmatmul.mubr.f32.gmra.mxu0 %v1071
        %v1198 = vpop.f32.mrf.mxu0
        %v1199 = vadd.f32 %v1120, %v1198
        %v1200 = vpop.f32.mrf.mxu0
        %1201 = vmatprep.mubr.f32.mxu0 %v1074
        %1202 = vmatmul.mubr.f32.gmra.mxu0 %v1073
        %v1203 = vpop.f32.mrf.mxu0
        %v1204 = vadd.f32 %v1120, %v1203
        %v1205 = vpop.f32.mrf.mxu0
        %1206 = vmatprep.mubr.f32.mxu0 %v1076
        %1207 = vmatmul.mubr.f32.gmra.mxu0 %v1075
        %v1208 = vpop.f32.mrf.mxu0
        %v1209 = vadd.f32 %v1120, %v1208
        %v1210 = vpop.f32.mrf.mxu0
        %1211 = vmatprep.mubr.f32.mxu0 %v1078
        %1212 = vmatmul.mubr.f32.gmra.mxu0 %v1077
        %v1213 = vpop.f32.mrf.mxu0
        %v1214 = vadd.f32 %v1120, %v1213
        %v1215 = vpop.f32.mrf.mxu0
        %1216 = vmatprep.mubr.f32.mxu0 %v1080
        %1217 = vmatmul.mubr.f32.gmra.mxu0 %v1079
        %v1218 = vpop.f32.mrf.mxu0
        %v1219 = vadd.f32 %v1120, %v1218
        %v1220 = vpop.f32.mrf.mxu0
        %1221 = vmatprep.mubr.f32.mxu0 %v1082
        %1222 = vmatmul.mubr.f32.gmra.mxu0 %v1081
        %v1223 = vpop.f32.mrf.mxu0
        %v1224 = vadd.f32 %v1120, %v1223
        %v1225 = vpop.f32.mrf.mxu0
        %1226 = vdwg.mxu0
        %v1227 = vmax.f32 %v1189, 0.0
        %v1228 = vmax.f32 %v1194, 0.0
        %v1229 = vmax.f32 %v1199, 0.0
        %v1230 = vmax.f32 %v1204, 0.0
        %v1231 = vmax.f32 %v1209, 0.0
        %v1232 = vmax.f32 %v1214, 0.0
        %v1233 = vmax.f32 %v1219, 0.0
        %v1234 = vmax.f32 %v1224, 0.0
        %v1235 = vld [vmem:[#allocation7] sm:$0xff]
        %v1236 = vld [vmem:[#allocation7 + $0x8] sm:$0xff]
        %v1237 = vld [vmem:[#allocation7 + $0x10] sm:$0xff]
        %v1238 = vld [vmem:[#allocation7 + $0x18] sm:$0xff]
        %v1239 = vld [vmem:[#allocation7 + $0x20] sm:$0xff]
        %v1240 = vld [vmem:[#allocation7 + $0x28] sm:$0xff]
        %v1241 = vld [vmem:[#allocation7 + $0x30] sm:$0xff]
        %v1242 = vld [vmem:[#allocation7 + $0x38] sm:$0xff]
        %v1243 = vld [vmem:[#allocation7 + $0x40] sm:$0xff]
        %v1244 = vld [vmem:[#allocation7 + $0x48] sm:$0xff]
        %v1245 = vld [vmem:[#allocation7 + $0x50] sm:$0xff]
        %v1246 = vld [vmem:[#allocation7 + $0x58] sm:$0xff]
        %v1247 = vld [vmem:[#allocation7 + $0x60] sm:$0xff]
        %v1248 = vld [vmem:[#allocation7 + $0x68] sm:$0xff]
        %v1249 = vld [vmem:[#allocation7 + $0x70] sm:$0xff]
        %v1250 = vld [vmem:[#allocation7 + $0x78] sm:$0xff]
        %v1251 = vld [vmem:[%s10] sm:$0x1]
        %v1253 = vlaneseq
        %v1254 = vshrl.u32 %v1253, 7
        %v1255 = vsub.s32 0, %v1254
        %v1256 = vrot.slane %v1251, %v1255
        %1258 = vmatprep.subr.mxu0 0.0
        %1259 = vmatpush1.msra.mxu0 %v1250
        %1260 = vmatprep.subr.mxu0 0.0
        %1261 = vmatpush1.msra.mxu0 %v1249
        %1262 = vmatprep.subr.mxu0 0.0
        %1263 = vmatpush1.msra.mxu0 %v1248
        %1264 = vmatprep.subr.mxu0 0.0
        %1265 = vmatpush1.msra.mxu0 %v1247
        %1266 = vmatprep.subr.mxu0 0.0
        %1267 = vmatpush1.msra.mxu0 %v1246
        %1268 = vmatprep.subr.mxu0 0.0
        %1269 = vmatpush1.msra.mxu0 %v1245
        %1270 = vmatprep.subr.mxu0 0.0
        %1271 = vmatpush1.msra.mxu0 %v1244
        %1272 = vmatprep.subr.mxu0 0.0
        %1273 = vmatpush1.msra.mxu0 %v1243
        %1274 = vmatprep.subr.mxu0 0.0
        %1275 = vmatpush1.msra.mxu0 %v1242
        %1276 = vmatprep.subr.mxu0 0.0
        %1277 = vmatpush1.msra.mxu0 %v1241
        %1278 = vmatprep.subr.mxu0 0.0
        %1279 = vmatpush1.msra.mxu0 %v1240
        %1280 = vmatprep.subr.mxu0 0.0
        %1281 = vmatpush1.msra.mxu0 %v1239
        %1282 = vmatprep.subr.mxu0 0.0
        %1283 = vmatpush1.msra.mxu0 %v1238
        %1284 = vmatprep.subr.mxu0 0.0
        %1285 = vmatpush1.msra.mxu0 %v1237
        %1286 = vmatprep.subr.mxu0 0.0
        %1287 = vmatpush1.msra.mxu0 %v1236
        %1288 = vmatprep.subr.mxu0 0.0
        %1289 = vmatpush1.msra.mxu0 %v1235
        %1290 = vmatprep.subr.mxu0 0.0
        %1291 = vmatpush2.msra.mxu0 0.0
        %1292 = vmatprep.subr.mxu0 0.0
        %1293 = vmatpush2.msra.mxu0 0.0
        %1294 = vmatprep.subr.mxu0 0.0
        %1295 = vmatpush2.msra.mxu0 0.0
        %1296 = vmatprep.subr.mxu0 0.0
        %1297 = vmatpush2.msra.mxu0 0.0
        %1298 = vmatprep.subr.mxu0 0.0
        %1299 = vmatpush2.msra.mxu0 0.0
        %1300 = vmatprep.subr.mxu0 0.0
        %1301 = vmatpush2.msra.mxu0 0.0
        %1302 = vmatprep.subr.mxu0 0.0
        %1303 = vmatpush2.msra.mxu0 0.0
        %1304 = vmatprep.subr.mxu0 0.0
        %1305 = vmatpush2.msra.mxu0 0.0
        %1306 = vmatprep.subr.mxu0 0.0
        %1307 = vmatpush2.msra.mxu0 0.0
        %1308 = vmatprep.subr.mxu0 0.0
        %1309 = vmatpush2.msra.mxu0 0.0
        %1310 = vmatprep.subr.mxu0 0.0
        %1311 = vmatpush2.msra.mxu0 0.0
        %1312 = vmatprep.subr.mxu0 0.0
        %1313 = vmatpush2.msra.mxu0 0.0
        %1314 = vmatprep.subr.mxu0 0.0
        %1315 = vmatpush2.msra.mxu0 0.0
        %1316 = vmatprep.subr.mxu0 0.0
        %1317 = vmatpush2.msra.mxu0 0.0
        %1318 = vmatprep.subr.mxu0 0.0
        %1319 = vmatpush2.msra.mxu0 0.0
        %1320 = vmatprep.subr.mxu0 0.0
        %1321 = vmatpush2.msra.mxu0 0.0
        %1322 = vmatprep.mubr.f32.mxu0 0.0
        %1323 = vmatmul.mubr.f32.gmra.mxu0 %v1227
        %v1324 = vpop.f32.mrf.mxu0
        %v1325 = vadd.f32 %v1256, %v1324
        %v1326 = vpop.f32.mrf.mxu0
        %1327 = vmatprep.mubr.f32.mxu0 0.0
        %1328 = vmatmul.mubr.f32.gmra.mxu0 %v1228
        %v1329 = vpop.f32.mrf.mxu0
        %v1330 = vadd.f32 %v1256, %v1329
        %v1331 = vpop.f32.mrf.mxu0
        %1332 = vmatprep.mubr.f32.mxu0 0.0
        %1333 = vmatmul.mubr.f32.gmra.mxu0 %v1229
        %v1334 = vpop.f32.mrf.mxu0
        %v1335 = vadd.f32 %v1256, %v1334
        %v1336 = vpop.f32.mrf.mxu0
        %1337 = vmatprep.mubr.f32.mxu0 0.0
        %1338 = vmatmul.mubr.f32.gmra.mxu0 %v1230
        %v1339 = vpop.f32.mrf.mxu0
        %v1340 = vadd.f32 %v1256, %v1339
        %v1341 = vpop.f32.mrf.mxu0
        %1342 = vmatprep.mubr.f32.mxu0 0.0
        %1343 = vmatmul.mubr.f32.gmra.mxu0 %v1231
        %v1344 = vpop.f32.mrf.mxu0
        %v1345 = vadd.f32 %v1256, %v1344
        %v1346 = vpop.f32.mrf.mxu0
        %1347 = vmatprep.mubr.f32.mxu0 0.0
        %1348 = vmatmul.mubr.f32.gmra.mxu0 %v1232
        %v1349 = vpop.f32.mrf.mxu0
        %v1350 = vadd.f32 %v1256, %v1349
        %v1351 = vpop.f32.mrf.mxu0
        %1352 = vmatprep.mubr.f32.mxu0 0.0
        %1353 = vmatmul.mubr.f32.gmra.mxu0 %v1233
        %v1354 = vpop.f32.mrf.mxu0
        %v1355 = vadd.f32 %v1256, %v1354
        %v1356 = vpop.f32.mrf.mxu0
        %1357 = vmatprep.mubr.f32.mxu0 0.0
        %1358 = vmatmul.mubr.f32.gmra.mxu0 %v1234
        %v1359 = vpop.f32.mrf.mxu0
        %v1360 = vadd.f32 %v1256, %v1359
        %v1361 = vpop.f32.mrf.mxu0
        %1362 = vdwg.mxu0
        %1363 = vst [vmem:[%s424] sm:$0xff] %v1325
        %1364 = vst [vmem:[%s424 + $0x8] sm:$0xff] %v1330
        %1365 = vst [vmem:[%s424 + $0x10] sm:$0xff] %v1335
        %1366 = vst [vmem:[%s424 + $0x18] sm:$0xff] %v1340
        %1367 = vst [vmem:[%s424 + $0x20] sm:$0xff] %v1345
        %1368 = vst [vmem:[%s424 + $0x28] sm:$0xff] %v1350
        %1369 = vst [vmem:[%s424 + $0x30] sm:$0xff] %v1355
        %1370 = vst [vmem:[%s424 + $0x38] sm:$0xff] %v1360
        %s1371 = sand.u32 %s271, 1
        %s1372 = scalar_lea.sflag [#allocation4], %s1371
        %s1373 = sand.u32 %s271, 1
        %s1374 = smul.addr %s1373, 64
        %s1375 = scalar_lea.vmem [#allocation8], %s1374
        // Predicated region
        $region77: #{tpu_custom_call.1} parent=63 // pred_check
          %p1376 = pneg %p281
        $region78: #{tpu_custom_call.1} parent=63 // pred_check_branch
          %1378 = sbr.rel (%p1376) target = $region80
        $region79: #{tpu_custom_call.1} parent=63 // pred_region
          %s1379 = smul.u32 8, %s27
          %s1381 = ssub.s32 1024, 1024
          %1382 = vsyncadd %s1372, %s1381
          %s1383 = smul.addr %s1379, 128
          %s1384 = scalar_lea.hbm %s11, %s1383
          %s1385 = sshll.u32 %s1375, 4
          %s1386 = int_to_ptr.vmem [resolvable:$true] %s1385
          %1391 = dma.vmem_to_hbm [thread:$0]  %s1386, 1024, %s1384, %s1372, 128, 128, 8
        $region80: #{tpu_custom_call.1} parent=63 // pred_fallthru
          _
      $region64: #{tpu_custom_call.1} parent=5 // pred_fallthru
        _
      %p1392 = scmp.le.s32.totalorder 2, %s22
      // Predicated region
      $region81: #{tpu_custom_call.1} parent=5 // pred_check
        %p1393 = pneg %p1392
      $region82: #{tpu_custom_call.1} parent=5 // pred_check_branch
        %1395 = sbr.rel (%p1393) target = $region84
      $region83: #{tpu_custom_call.1} parent=5 // pred_region
        %s1396 = ssub.s32 %s22, 2
        // Predicated region
        $region85: #{tpu_custom_call.1} parent=83 // pred_check
          %p1397 = pneg %p287
        $region86: #{tpu_custom_call.1} parent=83 // pred_check_branch
          %1399 = sbr.rel (%p1397) target = $region88
        $region87: #{tpu_custom_call.1} parent=83 // pred_region
          %s1400 = sand.u32 %s272, 1
          %s1401 = scalar_lea.sflag [#allocation4], %s1400
          %s1402 = sand.u32 %s272, 1
          %s1403 = smul.addr %s1402, 64
          %s1404 = scalar_lea.vmem [#allocation8], %s1403
          %1405 = dma.done %s1401, 1024
        $region88: #{tpu_custom_call.1} parent=83 // pred_fallthru
          _
      $region84: #{tpu_custom_call.1} parent=5 // pred_fallthru
        _
    $region6: #{tpu_custom_call.1} parent=1 // loop_footer
      %s26 = sadd.s32 1, %s22
    $region7: #{tpu_custom_call.1} parent=1 // loop_footer_branch
      %21 = sbr.rel target = $region3
    $region8: #{tpu_custom_call.1} parent=1 // loop_exit
      _
    %1406 = vsyncpa [#allocation3], 1
    %s1407 = scalar_lea.sflag [#allocation3], 1
    %1408 = vsyncpa %s1407, 1
    %1409 = vsyncpa [#allocation6], 1
    %1410 = vsyncpa [#allocation4], 1
    %s1411 = scalar_lea.sflag [#allocation4], 1
    %1412 = vsyncpa %s1411, 1

</llo_original>
